<compile_context>
chip_gen: v5e
topology: v5e:2x2
jax: 0.10.0
libtpu: 0.0.40
codegen_flags: <defaults>
</compile_context>

<pallas_src>
import functools
import math

import jax
import jax.numpy as jnp
from jax.experimental import pallas as pl
from jax.experimental.pallas import tpu as pltpu

_GN_EPS = 1e-5  # torch.nn.GroupNorm default eps
_LANE = 128


def _round_up(x: int, m: int) -> int:
    return (x + m - 1) // m * m


def _default_vmem_limit() -> int:
    """Per-generation VMEM budget: ~75% of physical, capped at 100 MiB.
    v5e/v6e (128 MiB) -> 96 MiB, v7x (64 MiB) -> 48 MiB."""
    cap = 64 * 1024 * 1024  # conservative fallback if the query fails
    try:
        info = pltpu.get_tpu_info()
        cap = int(getattr(info, "vmem_capacity_bytes", cap))
    except Exception:
        pass
    return min((cap * 3) // 4, 100 * 1024 * 1024)


def _gelu(h, approximate: bool):
    if approximate:
        c = math.sqrt(2.0 / math.pi)
        return 0.5 * h * (1.0 + jnp.tanh(c * (h + 0.044715 * h * h * h)))
    return 0.5 * h * (1.0 + jax.lax.erf(h * (1.0 / math.sqrt(2.0))))


def _groupnorm_rows(x_ref, gamma_ref, beta_ref):
    """GroupNorm(1, C) over the channel (lane) axis, two-pass, f32."""
    x = x_ref[...].astype(jnp.float32)                       # (TN, C)
    mean = jnp.mean(x, axis=-1, keepdims=True)
    xc = x - mean
    var = jnp.mean(xc * xc, axis=-1, keepdims=True)
    rstd = jax.lax.rsqrt(var + _GN_EPS)
    gamma = gamma_ref[...].astype(jnp.float32)                # (1, C)
    beta = beta_ref[...].astype(jnp.float32)                  # (1, C)
    return xc * (rstd * gamma) + beta


# ---------------------------------------------------------------------------
# Kernel 1: full weight residency (nk == 1).  No scratch, pure feed-forward.
# ---------------------------------------------------------------------------
def _forward_block_kernel_single(x_ref, gamma_ref, beta_ref,
                                 w1_ref, b1_ref, w2_ref, b2_ref,
                                 o_ref, *, approximate_gelu: bool):
    xn = _groupnorm_rows(x_ref, gamma_ref, beta_ref)          # (TN, C) f32
    h = jnp.dot(xn.astype(w1_ref.dtype), w1_ref[...],
                preferred_element_type=jnp.float32)           # (TN, H) f32
    h = _gelu(h + b1_ref[...].astype(jnp.float32), approximate_gelu)
    out = jnp.dot(h.astype(w2_ref.dtype), w2_ref[...],
                  preferred_element_type=jnp.float32)         # (TN, O) f32
    o_ref[...] = (out + b2_ref[...].astype(jnp.float32)).astype(o_ref.dtype)


# ---------------------------------------------------------------------------
# Kernel 2: hidden dim K-tiled (nk > 1).  GroupNorm'ed x cached in VMEM at
# k == 0; f32 accumulator initialized from the first chunk with b2 folded in.
# ---------------------------------------------------------------------------
def _forward_block_kernel_ktiled(x_ref, gamma_ref, beta_ref,
                                 w1_ref, b1_ref, w2_ref, b2_ref,
                                 o_ref, xn_ref, acc_ref, *,
                                 approximate_gelu: bool):
    k = pl.program_id(1)
    nk = pl.num_programs(1)

    @pl.when(k == 0)
    def _():
        xn = _groupnorm_rows(x_ref, gamma_ref, beta_ref)
        xn_ref[...] = xn.astype(xn_ref.dtype)                 # cached for all k

    h = jnp.dot(xn_ref[...], w1_ref[...],
                preferred_element_type=jnp.float32)           # (TN, th) f32
    h = _gelu(h + b1_ref[...].astype(jnp.float32), approximate_gelu)
    partial = jnp.dot(h.astype(w2_ref.dtype), w2_ref[...],
                      preferred_element_type=jnp.float32)     # (TN, O) f32

    @pl.when(k == 0)
    def _():
        acc_ref[...] = partial + b2_ref[...].astype(jnp.float32)

    @pl.when(k > 0)
    def _():
        acc_ref[...] += partial

    @pl.when(k == nk - 1)
    def _():
        o_ref[...] = acc_ref[...].astype(o_ref.dtype)


# ---------------------------------------------------------------------------
# One-time parameter prep (hoisted out of the per-call path).
# ---------------------------------------------------------------------------
def prepare_params(gamma, beta, w1, b1, w2, b2, *, compute_dtype=None):
    """Transpose weights to (in, out), zero-pad H and O to multiples of 128
    (padded hidden units contribute exactly 0; padded output columns are
    sliced off), reshape vectors to lane-resident (1, dim), optionally
    downcast matmul operands (e.g. bf16) while biases/affine stay f32."""
    cd = w1.dtype if compute_dtype is None else compute_dtype
    H, C = w1.shape
    O = w2.shape[0]
    H_pad = _round_up(H, _LANE)
    O_pad = _round_up(O, _LANE)

    w1_t = w1.T.astype(cd)                      # (C, H)
    w2_t = w2.T.astype(cd)                      # (H, O)
    b1f = b1.astype(jnp.float32)
    b2f = b2.astype(jnp.float32)
    if H_pad != H:
        w1_t = jnp.pad(w1_t, ((0, 0), (0, H_pad - H)))
        w2_t = jnp.pad(w2_t, ((0, H_pad - H), (0, 0)))
        b1f = jnp.pad(b1f, (0, H_pad - H))
    if O_pad != O:
        w2_t = jnp.pad(w2_t, ((0, 0), (0, O_pad - O)))
        b2f = jnp.pad(b2f, (0, O_pad - O))

    return dict(
        gamma=gamma.reshape(1, C).astype(jnp.float32),
        beta=beta.reshape(1, C).astype(jnp.float32),
        w1_t=w1_t,                              # (C, H_pad)
        b1=b1f.reshape(1, H_pad),
        w2_t=w2_t,                              # (H_pad, O_pad)
        b2=b2f.reshape(1, O_pad),
        out_dim=int(O),
    )


# ---------------------------------------------------------------------------
# Wrapper: tile selection + pallas_call.
# ---------------------------------------------------------------------------
def forward_block(x, params, *, tile_n=None, tile_h=None,
                  approximate_gelu: bool = False, vmem_limit_bytes=None):
    """x: (N, C). params from prepare_params (torch layout w1 (H,C), w2 (O,H)).
    tile_n / tile_h are optional upper bounds; by default both are derived
    from the per-generation VMEM budget."""
    N, C = x.shape
    w1_t, w2_t = params["w1_t"], params["w2_t"]
    assert w1_t.shape[0] == C, "params do not match x channel dim"
    H_pad = w1_t.shape[1]
    O_pad = w2_t.shape[1]
    O = int(params.get("out_dim", O_pad))
    wdtype = w1_t.dtype

    xb = jnp.dtype(x.dtype).itemsize
    wb = jnp.dtype(wdtype).itemsize
    ob = xb  # output kept in x dtype

    if vmem_limit_bytes is None:
        vmem_limit_bytes = _default_vmem_limit()
    tile_budget = int(vmem_limit_bytes * 0.9)   # headroom for compiler scratch

    n8 = _round_up(max(N, 1), 8)

    # Row-tile cap: user bound, megacore (>=2 row tiles on v7x), batch size.
    tn_cap = 1024
    if tile_n is not None:
        tn_cap = min(tn_cap, max(8, _round_up(int(tile_n), 8)))
    if n8 >= 16:
        tn_cap = min(tn_cap, _round_up(-(-N // 2), 8))
    tn_cap = max(8, min(tn_cap, n8))

    # Hidden-chunk candidates: full residency first (nk=1), then 128-multiple
    # divisors of the (already 128-padded) hidden dim.
    cand_th = [H_pad] + [t for t in (8192, 4096, 2048, 1024, 512, 256, 128)
                         if t < H_pad and H_pad % t == 0]
    if tile_h is not None and tile_h <= H_pad and H_pad % int(tile_h) == 0:
        cand_th = [int(tile_h)]

    chosen = None
    for th in cand_th:
        nk = H_pad // th
        # Double-buffered BlockSpec residency estimate.
        fixed = 2 * (C * th + th * O_pad) * wb          # W1/W2 chunks
        fixed += 2 * (th + O_pad + 2 * C) * 4           # b1, b2, gamma, beta
        per_row = 2 * C * xb + 2 * O_pad * ob           # x tile + out tile
        if nk > 1:
            per_row += C * wb + O_pad * 4               # xn cache + f32 acc
        avail = tile_budget - fixed
        if avail < 8 * per_row:
            continue
        tn = min(tn_cap, n8, (avail // per_row) // 8 * 8)
        chosen = (int(max(8, tn)), int(th), int(nk))
        break
    if chosen is None:
        # Smallest-footprint fallback; compiler will report if even this is
        # too large for the configured VMEM limit.
        th = cand_th[-1]
        chosen = (8, int(th), int(H_pad // th))
    tn, th, nk = chosen

    # Zero-pad the batch so the grid covers it exactly.
    n_pad = _round_up(N, tn)
    xp = x if n_pad == N else jnp.pad(x, ((0, n_pad - N), (0, 0)))

    # Advisory cost estimate for the XLA scheduler.
    cost = pl.CostEstimate(
        flops=int(2 * N * (C * H_pad + H_pad * O_pad)),
        transcendentals=int(N * H_pad),
        bytes_accessed=int(N * C * xb + (C * H_pad + H_pad * O_pad) * wb
                           + (H_pad + O_pad + 2 * C) * 4 + N * O_pad * ob),
    )

    if nk == 1:
        # Full weight residency: constant index_maps => weights DMA'd once and
        # stay resident across all row tiles.
        kernel = functools.partial(_forward_block_kernel_single,
                                   approximate_gelu=approximate_gelu)
        grid = (n_pad // tn,)
        in_specs = [
            pl.BlockSpec((tn, C), lambda i: (i, 0)),       # x tile
            pl.BlockSpec((1, C), lambda i: (0, 0)),        # gamma
            pl.BlockSpec((1, C), lambda i: (0, 0)),        # beta
            pl.BlockSpec((C, H_pad), lambda i: (0, 0)),    # W1^T (resident)
            pl.BlockSpec((1, H_pad), lambda i: (0, 0)),    # b1
            pl.BlockSpec((H_pad, O_pad), lambda i: (0, 0)),  # W2^T (resident)
            pl.BlockSpec((1, O_pad), lambda i: (0, 0)),    # b2
        ]
        out_specs = pl.BlockSpec((tn, O_pad), lambda i: (i, 0))
        scratch_shapes = []
        dim_sem = ("parallel",)
    else:
        kernel = functools.partial(_forward_block_kernel_ktiled,
                                   approximate_gelu=approximate_gelu)
        grid = (n_pad // tn, nk)
        in_specs = [
            pl.BlockSpec((tn, C), lambda i, k: (i, 0)),    # x tile (k-invariant)
            pl.BlockSpec((1, C), lambda i, k: (0, 0)),     # gamma
            pl.BlockSpec((1, C), lambda i, k: (0, 0)),     # beta
            pl.BlockSpec((C, th), lambda i, k: (0, k)),    # W1^T chunk
            pl.BlockSpec((1, th), lambda i, k: (0, k)),    # b1 chunk
            pl.BlockSpec((th, O_pad), lambda i, k: (k, 0)),  # W2^T chunk
            pl.BlockSpec((1, O_pad), lambda i, k: (0, 0)),   # b2
        ]
        out_specs = pl.BlockSpec((tn, O_pad), lambda i, k: (i, 0))
        scratch_shapes = [
            pltpu.VMEM((tn, C), wdtype),        # cached GroupNorm output
            pltpu.VMEM((tn, O_pad), jnp.float32),  # f32 accumulator
        ]
        dim_sem = ("parallel", "arbitrary")

    out = pl.pallas_call(
        kernel,
        out_shape=jax.ShapeDtypeStruct((n_pad, O_pad), x.dtype),
        grid_spec=pltpu.PrefetchScalarGridSpec(
            num_scalar_prefetch=0,
            grid=grid,
            in_specs=in_specs,
            out_specs=out_specs,
            scratch_shapes=scratch_shapes,
        ),
        compiler_params=pltpu.CompilerParams(
            dimension_semantics=dim_sem,
            vmem_limit_bytes=int(vmem_limit_bytes),
        ),
        cost_estimate=cost,
    )(xp, params["gamma"], params["beta"], params["w1_t"], params["b1"],
      params["w2_t"], params["b2"])

    if n_pad != N or O_pad != O:
        out = out[:N, :O]
    return out


# ---------------------------------------------------------------------------
# Pure-JAX reference (mirrors the torch module with default args).
# ---------------------------------------------------------------------------
def _reference(x, gamma, beta, w1, b1, w2, b2):
    xf = x.astype(jnp.float32)
    mean = jnp.mean(xf, axis=-1, keepdims=True)
    var = jnp.mean((xf - mean) ** 2, axis=-1, keepdims=True)
    xn = (xf - mean) / jnp.sqrt(var + _GN_EPS) * gamma + beta
    h = jnp.dot(xn, w1.T, precision=jax.lax.Precision.HIGHEST) + b1
    h = 0.5 * h * (1.0 + jax.lax.erf(h / math.sqrt(2.0)))
    o = jnp.dot(h, w2.T, precision=jax.lax.Precision.HIGHEST) + b2
    return o.astype(x.dtype)


def _make_case(key, N, C, H, O):
    kx, k1, k2, k3, k4, k5, k6 = jax.random.split(key, 7)
    x = jax.random.normal(kx, (N, C), dtype=jnp.float32)
    gamma = 1.0 + 0.1 * jax.random.normal(k5, (C,), jnp.float32)
    beta = 0.1 * jax.random.normal(k6, (C,), jnp.float32)
    w1 = jax.random.normal(k1, (H, C), jnp.float32) * (1.0 / math.sqrt(C))
    b1 = 0.01 * jax.random.normal(k2, (H,), jnp.float32)
    w2 = jax.random.normal(k3, (O, H), jnp.float32) * (1.0 / math.sqrt(H))
    b2 = 0.01 * jax.random.normal(k4, (O,), jnp.float32)
    return x, gamma, beta, w1, b1, w2, b2


if __name__ == "__main__":
    root = jax.random.PRNGKey(0)
    k_a, k_b, k_c = jax.random.split(root, 3)

    # Case A: module defaults (hid_dim=256, out_dim=in_dim); auto tiling picks
    # full weight residency (nk=1) and exercises batch padding (N=300).
    xA, *pA = _make_case(k_a, 300, 128, 256, 128)
    prmA = prepare_params(*pA)
    outA = jax.block_until_ready(forward_block(xA, prmA))
    refA = _reference(xA, *pA)
    assert outA.shape == refA.shape
    assert jnp.allclose(outA, refA, atol=2e-4, rtol=2e-4), (
        f"case A mismatch, max abs err={float(jnp.max(jnp.abs(outA - refA)))}")

    # Case B: forced hidden-dim K-tiling (tile_h=128 -> nk=2) to exercise the
    # accumulator path, plus non-multiple batch padding.
    xB, *pB = _make_case(k_b, 200, 128, 256, 128)
    prmB = prepare_params(*pB)
    outB = jax.block_until_ready(forward_block(xB, prmB, tile_n=256, tile_h=128))
    refB = _reference(xB, *pB)
    assert outB.shape == refB.shape
    assert jnp.allclose(outB, refB, atol=2e-4, rtol=2e-4), (
        f"case B mismatch, max abs err={float(jnp.max(jnp.abs(outB - refB)))}")

    # Case C: C=O=96 (non-lane-multiple output -> padded to 128 and sliced)
    # and H=200 (zero-padded hidden units).
    xC, *pC = _make_case(k_c, 64, 96, 200, 96)
    prmC = prepare_params(*pC)
    outC = jax.block_until_ready(forward_block(xC, prmC))
    refC = _reference(xC, *pC)
    assert outC.shape == refC.shape
    assert jnp.allclose(outC, refC, atol=2e-4, rtol=2e-4), (
        f"case C mismatch, max abs err={float(jnp.max(jnp.abs(outC - refC)))}")

    print("KERNEL_OK")
</pallas_src>

<mosaic_0001>
module attributes {stable_mosaic.version = 11 : i64} {
  func.func @_forward_block_kernel_single(%arg0: i32, %arg1: memref<152x128xf32, #tpu.memory_space<vmem>>, %arg2: memref<1x128xf32, #tpu.memory_space<vmem>>, %arg3: memref<1x128xf32, #tpu.memory_space<vmem>>, %arg4: memref<128x256xf32, #tpu.memory_space<vmem>>, %arg5: memref<1x256xf32, #tpu.memory_space<vmem>>, %arg6: memref<256x128xf32, #tpu.memory_space<vmem>>, %arg7: memref<1x128xf32, #tpu.memory_space<vmem>>, %arg8: memref<152x128xf32, #tpu.memory_space<vmem>>) attributes {dimension_semantics = [#tpu.dimension_semantics<parallel>], iteration_bounds = array<i64: 2>, scalar_prefetch = 0 : i64, scratch_operands = 0 : i64, tpu.core_type = #tpu.core_type<tc>, window_params = [{transform_indices = @transform_0, window_bounds = array<i64: 152, 128>}, {pipeline_mode = #tpu.pipeline_mode<synchronous>, transform_indices = @transform_1, window_bounds = array<i64: 1, 128>}, {pipeline_mode = #tpu.pipeline_mode<synchronous>, transform_indices = @transform_2, window_bounds = array<i64: 1, 128>}, {pipeline_mode = #tpu.pipeline_mode<synchronous>, transform_indices = @transform_3, window_bounds = array<i64: 128, 256>}, {pipeline_mode = #tpu.pipeline_mode<synchronous>, transform_indices = @transform_4, window_bounds = array<i64: 1, 256>}, {pipeline_mode = #tpu.pipeline_mode<synchronous>, transform_indices = @transform_5, window_bounds = array<i64: 256, 128>}, {pipeline_mode = #tpu.pipeline_mode<synchronous>, transform_indices = @transform_6, window_bounds = array<i64: 1, 128>}, {transform_indices = @transform_7, window_bounds = array<i64: 152, 128>}]} {
    %c0 = arith.constant 0 : index
    %c0_0 = arith.constant 0 : index
    %0 = vector.load %arg1[%c0, %c0_0] : memref<152x128xf32, #tpu.memory_space<vmem>>, vector<152x128xf32>
    %cst = arith.constant dense<0.000000e+00> : vector<152xf32>
    %1 = vector.multi_reduction <add>, %0, %cst [1] : vector<152x128xf32> to vector<152xf32>
    %2 = vector.shape_cast %1 : vector<152xf32> to vector<152x1xf32>
    %cst_1 = arith.constant 1.280000e+02 : f32
    %3 = vector.broadcast %cst_1 : f32 to vector<152x1xf32>
    %4 = arith.divf %2, %3 : vector<152x1xf32>
    %5 = vector.broadcast %4 : vector<152x1xf32> to vector<152x128xf32>
    %6 = arith.subf %0, %5 : vector<152x128xf32>
    %7 = arith.mulf %6, %6 : vector<152x128xf32>
    %cst_2 = arith.constant dense<0.000000e+00> : vector<152xf32>
    %8 = vector.multi_reduction <add>, %7, %cst_2 [1] : vector<152x128xf32> to vector<152xf32>
    %9 = vector.shape_cast %8 : vector<152xf32> to vector<152x1xf32>
    %cst_3 = arith.constant 1.280000e+02 : f32
    %10 = vector.broadcast %cst_3 : f32 to vector<152x1xf32>
    %11 = arith.divf %9, %10 : vector<152x1xf32>
    %cst_4 = arith.constant 9.99999974E-6 : f32
    %12 = vector.broadcast %cst_4 : f32 to vector<152x1xf32>
    %13 = arith.addf %11, %12 : vector<152x1xf32>
    %14 = math.rsqrt %13 : vector<152x1xf32>
    %c0_5 = arith.constant 0 : index
    %c0_6 = arith.constant 0 : index
    %15 = vector.load %arg2[%c0_5, %c0_6] : memref<1x128xf32, #tpu.memory_space<vmem>>, vector<1x128xf32>
    %c0_7 = arith.constant 0 : index
    %c0_8 = arith.constant 0 : index
    %16 = vector.load %arg3[%c0_7, %c0_8] : memref<1x128xf32, #tpu.memory_space<vmem>>, vector<1x128xf32>
    %17 = vector.broadcast %14 : vector<152x1xf32> to vector<152x128xf32>
    %18 = vector.broadcast %15 : vector<1x128xf32> to vector<152x128xf32>
    %19 = arith.mulf %17, %18 : vector<152x128xf32>
    %20 = arith.mulf %6, %19 : vector<152x128xf32>
    %21 = vector.broadcast %16 : vector<1x128xf32> to vector<152x128xf32>
    %22 = arith.addf %20, %21 : vector<152x128xf32>
    %c0_9 = arith.constant 0 : index
    %c0_10 = arith.constant 0 : index
    %23 = vector.load %arg4[%c0_9, %c0_10] : memref<128x256xf32, #tpu.memory_space<vmem>>, vector<128x256xf32>
    %cst_11 = arith.constant dense<0.000000e+00> : vector<152x256xf32>
    %24 = tpu.matmul %22, %23, %cst_11 {dimension_numbers = #tpu.dot_dimension_numbers<[1], [0], [0], [1], [0, 0, 1, 1], [], []>} : vector<152x128xf32>, vector<128x256xf32>, vector<152x256xf32> -> vector<152x256xf32>
    %c0_12 = arith.constant 0 : index
    %c0_13 = arith.constant 0 : index
    %25 = vector.load %arg5[%c0_12, %c0_13] : memref<1x256xf32, #tpu.memory_space<vmem>>, vector<1x256xf32>
    %26 = vector.broadcast %25 : vector<1x256xf32> to vector<152x256xf32>
    %27 = arith.addf %24, %26 : vector<152x256xf32>
    %cst_14 = arith.constant 5.000000e-01 : f32
    %28 = vector.broadcast %cst_14 : f32 to vector<152x256xf32>
    %29 = arith.mulf %28, %27 : vector<152x256xf32>
    %cst_15 = arith.constant 0.707106769 : f32
    %30 = vector.broadcast %cst_15 : f32 to vector<152x256xf32>
    %31 = arith.mulf %27, %30 : vector<152x256xf32>
    %32 = math.erf %31 : vector<152x256xf32>
    %cst_16 = arith.constant 1.000000e+00 : f32
    %33 = vector.broadcast %cst_16 : f32 to vector<152x256xf32>
    %34 = arith.addf %33, %32 : vector<152x256xf32>
    %35 = arith.mulf %29, %34 : vector<152x256xf32>
    %c0_17 = arith.constant 0 : index
    %c0_18 = arith.constant 0 : index
    %36 = vector.load %arg6[%c0_17, %c0_18] : memref<256x128xf32, #tpu.memory_space<vmem>>, vector<256x128xf32>
    %cst_19 = arith.constant dense<0.000000e+00> : vector<152x128xf32>
    %37 = tpu.matmul %35, %36, %cst_19 {dimension_numbers = #tpu.dot_dimension_numbers<[1], [0], [0], [1], [0, 0, 1, 1], [], []>} : vector<152x256xf32>, vector<256x128xf32>, vector<152x128xf32> -> vector<152x128xf32>
    %c0_20 = arith.constant 0 : index
    %c0_21 = arith.constant 0 : index
    %38 = vector.load %arg7[%c0_20, %c0_21] : memref<1x128xf32, #tpu.memory_space<vmem>>, vector<1x128xf32>
    %39 = vector.broadcast %38 : vector<1x128xf32> to vector<152x128xf32>
    %40 = arith.addf %37, %39 : vector<152x128xf32>
    %c0_22 = arith.constant 0 : index
    %c0_23 = arith.constant 0 : index
    %41 = vector.load %arg8[%c0_22, %c0_23] : memref<152x128xf32, #tpu.memory_space<vmem>>, vector<152x128xf32>
    tpu.vector_store %arg8[%c0_22, %c0_23], %40 {strides = array<i32>} : memref<152x128xf32, #tpu.memory_space<vmem>>, vector<152x128xf32>,
    return
  }
  func.func @transform_0(%arg0: i32) -> (i32, i32) {
    %c0_i32 = arith.constant 0 : i32
    %c0_i32_0 = arith.constant 0 : i32
    return %arg0, %c0_i32 : i32, i32
  }
  func.func @transform_1(%arg0: i32) -> (i32, i32) {
    %c0_i32 = arith.constant 0 : i32
    %c0_i32_0 = arith.constant 0 : i32
    %c0_i32_1 = arith.constant 0 : i32
    return %c0_i32, %c0_i32_0 : i32, i32
  }
  func.func @transform_2(%arg0: i32) -> (i32, i32) {
    %c0_i32 = arith.constant 0 : i32
    %c0_i32_0 = arith.constant 0 : i32
    %c0_i32_1 = arith.constant 0 : i32
    return %c0_i32, %c0_i32_0 : i32, i32
  }
  func.func @transform_3(%arg0: i32) -> (i32, i32) {
    %c0_i32 = arith.constant 0 : i32
    %c0_i32_0 = arith.constant 0 : i32
    %c0_i32_1 = arith.constant 0 : i32
    return %c0_i32, %c0_i32_0 : i32, i32
  }
  func.func @transform_4(%arg0: i32) -> (i32, i32) {
    %c0_i32 = arith.constant 0 : i32
    %c0_i32_0 = arith.constant 0 : i32
    %c0_i32_1 = arith.constant 0 : i32
    return %c0_i32, %c0_i32_0 : i32, i32
  }
  func.func @transform_5(%arg0: i32) -> (i32, i32) {
    %c0_i32 = arith.constant 0 : i32
    %c0_i32_0 = arith.constant 0 : i32
    %c0_i32_1 = arith.constant 0 : i32
    return %c0_i32, %c0_i32_0 : i32, i32
  }
  func.func @transform_6(%arg0: i32) -> (i32, i32) {
    %c0_i32 = arith.constant 0 : i32
    %c0_i32_0 = arith.constant 0 : i32
    %c0_i32_1 = arith.constant 0 : i32
    return %c0_i32, %c0_i32_0 : i32, i32
  }
  func.func @transform_7(%arg0: i32) -> (i32, i32) {
    %c0_i32 = arith.constant 0 : i32
    %c0_i32_0 = arith.constant 0 : i32
    return %arg0, %c0_i32 : i32, i32
  }
}

</mosaic_0001>

<llo_original>
// kernel: tpu_custom_call.1
$region0: #{tpu_custom_call.1}
  #allocation0 [shape = 'u32[]', space=smem, size = 0x4, offset = 0x4, fixed_abs, tag = 'smem constant byte address 0x4 - core index']
  #allocation1 [shape = 'u32[72,128]{1,0:T(1,128)}', space=vmem, size = 0x9000, scoped, tag = 'internal scratch']
  %s0 = inlined_call_operand.hbm [shape: f32[304,128], index: 0, kind: input, shape index: {}]
  %s1 = inlined_call_operand.hbm [shape: f32[1,128], index: 1, kind: input, shape index: {}]
  %s2 = inlined_call_operand.vmem [shape: f32[1,128], index: 2, kind: input, shape index: {}]
  %s3 = inlined_call_operand.hbm [shape: f32[128,256], index: 3, kind: input, shape index: {}]
  %s4 = inlined_call_operand.vmem [shape: f32[1,256], index: 4, kind: input, shape index: {}]
  %s5 = inlined_call_operand.hbm [shape: f32[256,128], index: 5, kind: input, shape index: {}]
  %s6 = inlined_call_operand.vmem [shape: f32[1,128], index: 6, kind: input, shape index: {}]
  %s7 = inlined_call_operand.hbm [shape: f32[304,128], index: 7, kind: output, shape index: {}]
  %s8 = sld [smem:[#allocation0]]
  $region77: #{tpu_custom_call.1} parent=0
    _
  %s10 = ssub.s32 1, %s8
  %s11 = scalar_select 0, %s10, %s8
  $region1: #{tpu_custom_call.1} parent=0
    #allocation2 [shape = 'u8[155648]{0}', space=vmem, size = 0x26000, scoped, tag = 'input window, operand 0']
    #allocation3 [shape = 's32[2]{0}', space=sflag, size = 0x8, scoped, tag = 'scoped memory for tpu_custom_call.1']
    #allocation4 [shape = 's32[2]{0}', space=sflag, size = 0x8, scoped, tag = 'scoped memory for tpu_custom_call.1']
    #allocation5 [shape = 'u8[512]{0}', space=vmem, size = 0x400, scoped, tag = 'input window, operand 1, single buffered']
    #allocation6 [shape = 's32[1]{0}', space=sflag, size = 0x4, scoped, tag = 'scoped memory for tpu_custom_call.1']
    #allocation7 [shape = 'u8[131072]{0}', space=vmem, size = 0x20000, scoped, tag = 'input window, operand 3, single buffered']
    #allocation8 [shape = 'u8[131072]{0}', space=vmem, size = 0x20000, scoped, tag = 'input window, operand 5, single buffered']
    #allocation9 [shape = 's32[1]{0}', space=sflag, size = 0x4, scoped, tag = 'scoped memory for tpu_custom_call.1']
    #allocation10 [shape = 'u8[155648]{0}', space=vmem, size = 0x26000, scoped, tag = 'output window, operand 0']
    %12 = vsyncpa [#allocation3], 0
    %s13 = scalar_lea.sflag [#allocation3], 1
    %14 = vsyncpa %s13, 0
    %15 = vsyncpa [#allocation6], 0
    %16 = vsyncpa [#allocation9], 0
    %17 = vsyncpa [#allocation4], 0
    %s18 = scalar_lea.sflag [#allocation4], 1
    %19 = vsyncpa %s18, 0
    loop: start=0, step=1, limit=4
    $region2: #{tpu_custom_call.1} parent=1 // loop_pre_header
      _
    $region3: #{tpu_custom_call.1} parent=1 // loop_header
      %s21 = sphi 0, %s25
      %p22 = scmp.ge.s32.totalorder %s21, 4
      %s31 = sphi 0, %s33
      %s34 = sphi 0, %s31
      %s35 = sphi 0, %s34
      %s51 = sphi 0, %s35
      %s55 = sphi 0, %s55
      %s57 = sphi 0, %s55
      %s58 = sphi 0, %s57
      %s72 = sphi 0, %s58
      %s76 = sphi 0, %s76
      %s78 = sphi 0, %s76
      %s79 = sphi 0, %s78
      %s93 = sphi 0, %s79
      %s97 = sphi 0, %s97
      %s99 = sphi 0, %s97
      %s100 = sphi 0, %s99
      %s114 = sphi 0, %s100
      %s118 = sphi 0, %s118
      %s120 = sphi 0, %s118
      %s121 = sphi 0, %s120
      %s135 = sphi 0, %s121
      %s139 = sphi 0, %s139
      %s141 = sphi 0, %s139
      %s142 = sphi 0, %s141
      %s156 = sphi 0, %s142
      %s160 = sphi 0, %s160
      %s162 = sphi 0, %s160
      %s163 = sphi 0, %s162
      %s177 = sphi 0, %s163
      %s183 = sphi 0, %s185
      %s186 = sphi 0, %s183
      %s187 = sphi 0, %s186
      %s203 = sphi 0, %s187
    $region4: #{tpu_custom_call.1} parent=1 // loop_header_branch
      %24 = sbr.rel (%p22) target = $region8
    $region5: #{tpu_custom_call.1} parent=1 // loop_body
      %s26 = ssub.s32 %s21, 1
      %s27 = ssub.s32 %s21, 2
      %s28 = sadd.s32 %s21, 1
      %s29 = ssub.s32 %s21, %s28
      %p30 = scmp.eq.s32.totalorder %s29, 0
      %s32 = sadd.s32 %s31, 1
      %s33 = scalar_select %p30, %s31, %s32
      %p36 = pneg %p30
      %p37 = scmp.eq.s32.totalorder %s21, 1
      %p38 = por %p36, %p37
      %p39 = scmp.ne.s32.totalorder %s31, %s34
      %p40 = scmp.eq.s32.totalorder %s21, 0
      %p41 = por %p39, %p40
      %p42 = scmp.ne.s32.totalorder %s31, %s34
      %p43 = scmp.eq.s32.totalorder %s26, 1
      %p44 = por %p42, %p43
      %p45 = scmp.ne.s32.totalorder %s34, %s35
      %p46 = scmp.eq.s32.totalorder %s26, 0
      %p47 = por %p45, %p46
      %p48 = scmp.ne.s32.totalorder %s34, %s35
      %p49 = scmp.eq.s32.totalorder %s27, 1
      %p50 = por %p48, %p49
      %p52 = scmp.ne.s32.totalorder %s35, %s51
      %p53 = scmp.eq.s32.totalorder %s27, 0
      %p54 = por %p52, %p53
      %s56 = sadd.s32 %s55, 1
      %p59 = scmp.eq.s32.totalorder %s21, 1
      %p60 = scmp.ne.s32.totalorder %s55, %s57
      %p61 = scmp.eq.s32.totalorder %s21, 0
      %p62 = por %p60, %p61
      %p63 = scmp.ne.s32.totalorder %s55, %s57
      %p64 = scmp.eq.s32.totalorder %s26, 1
      %p65 = por %p63, %p64
      %p66 = scmp.ne.s32.totalorder %s57, %s58
      %p67 = scmp.eq.s32.totalorder %s26, 0
      %p68 = por %p66, %p67
      %p69 = scmp.ne.s32.totalorder %s57, %s58
      %p70 = scmp.eq.s32.totalorder %s27, 1
      %p71 = por %p69, %p70
      %p73 = scmp.ne.s32.totalorder %s58, %s72
      %p74 = scmp.eq.s32.totalorder %s27, 0
      %p75 = por %p73, %p74
      %s77 = sadd.s32 %s76, 1
      %p80 = scmp.eq.s32.totalorder %s21, 1
      %p81 = scmp.ne.s32.totalorder %s76, %s78
      %p82 = scmp.eq.s32.totalorder %s21, 0
      %p83 = por %p81, %p82
      %p84 = scmp.ne.s32.totalorder %s76, %s78
      %p85 = scmp.eq.s32.totalorder %s26, 1
      %p86 = por %p84, %p85
      %p87 = scmp.ne.s32.totalorder %s78, %s79
      %p88 = scmp.eq.s32.totalorder %s26, 0
      %p89 = por %p87, %p88
      %p90 = scmp.ne.s32.totalorder %s78, %s79
      %p91 = scmp.eq.s32.totalorder %s27, 1
      %p92 = por %p90, %p91
      %p94 = scmp.ne.s32.totalorder %s79, %s93
      %p95 = scmp.eq.s32.totalorder %s27, 0
      %p96 = por %p94, %p95
      %s98 = sadd.s32 %s97, 1
      %p101 = scmp.eq.s32.totalorder %s21, 1
      %p102 = scmp.ne.s32.totalorder %s97, %s99
      %p103 = scmp.eq.s32.totalorder %s21, 0
      %p104 = por %p102, %p103
      %p105 = scmp.ne.s32.totalorder %s97, %s99
      %p106 = scmp.eq.s32.totalorder %s26, 1
      %p107 = por %p105, %p106
      %p108 = scmp.ne.s32.totalorder %s99, %s100
      %p109 = scmp.eq.s32.totalorder %s26, 0
      %p110 = por %p108, %p109
      %p111 = scmp.ne.s32.totalorder %s99, %s100
      %p112 = scmp.eq.s32.totalorder %s27, 1
      %p113 = por %p111, %p112
      %p115 = scmp.ne.s32.totalorder %s100, %s114
      %p116 = scmp.eq.s32.totalorder %s27, 0
      %p117 = por %p115, %p116
      %s119 = sadd.s32 %s118, 1
      %p122 = scmp.eq.s32.totalorder %s21, 1
      %p123 = scmp.ne.s32.totalorder %s118, %s120
      %p124 = scmp.eq.s32.totalorder %s21, 0
      %p125 = por %p123, %p124
      %p126 = scmp.ne.s32.totalorder %s118, %s120
      %p127 = scmp.eq.s32.totalorder %s26, 1
      %p128 = por %p126, %p127
      %p129 = scmp.ne.s32.totalorder %s120, %s121
      %p130 = scmp.eq.s32.totalorder %s26, 0
      %p131 = por %p129, %p130
      %p132 = scmp.ne.s32.totalorder %s120, %s121
      %p133 = scmp.eq.s32.totalorder %s27, 1
      %p134 = por %p132, %p133
      %p136 = scmp.ne.s32.totalorder %s121, %s135
      %p137 = scmp.eq.s32.totalorder %s27, 0
      %p138 = por %p136, %p137
      %s140 = sadd.s32 %s139, 1
      %p143 = scmp.eq.s32.totalorder %s21, 1
      %p144 = scmp.ne.s32.totalorder %s139, %s141
      %p145 = scmp.eq.s32.totalorder %s21, 0
      %p146 = por %p144, %p145
      %p147 = scmp.ne.s32.totalorder %s139, %s141
      %p148 = scmp.eq.s32.totalorder %s26, 1
      %p149 = por %p147, %p148
      %p150 = scmp.ne.s32.totalorder %s141, %s142
      %p151 = scmp.eq.s32.totalorder %s26, 0
      %p152 = por %p150, %p151
      %p153 = scmp.ne.s32.totalorder %s141, %s142
      %p154 = scmp.eq.s32.totalorder %s27, 1
      %p155 = por %p153, %p154
      %p157 = scmp.ne.s32.totalorder %s142, %s156
      %p158 = scmp.eq.s32.totalorder %s27, 0
      %p159 = por %p157, %p158
      %s161 = sadd.s32 %s160, 1
      %p164 = scmp.eq.s32.totalorder %s21, 1
      %p165 = scmp.ne.s32.totalorder %s160, %s162
      %p166 = scmp.eq.s32.totalorder %s21, 0
      %p167 = por %p165, %p166
      %p168 = scmp.ne.s32.totalorder %s160, %s162
      %p169 = scmp.eq.s32.totalorder %s26, 1
      %p170 = por %p168, %p169
      %p171 = scmp.ne.s32.totalorder %s162, %s163
      %p172 = scmp.eq.s32.totalorder %s26, 0
      %p173 = por %p171, %p172
      %p174 = scmp.ne.s32.totalorder %s162, %s163
      %p175 = scmp.eq.s32.totalorder %s27, 1
      %p176 = por %p174, %p175
      %p178 = scmp.ne.s32.totalorder %s163, %s177
      %p179 = scmp.eq.s32.totalorder %s27, 0
      %p180 = por %p178, %p179
      %s181 = ssub.s32 %s21, %s28
      %p182 = scmp.eq.s32.totalorder %s181, 0
      %s184 = sadd.s32 %s183, 1
      %s185 = scalar_select %p182, %s183, %s184
      %p188 = pneg %p182
      %p189 = scmp.eq.s32.totalorder %s21, 1
      %p190 = por %p188, %p189
      %p191 = scmp.ne.s32.totalorder %s183, %s186
      %p192 = scmp.eq.s32.totalorder %s21, 0
      %p193 = por %p191, %p192
      %p194 = scmp.ne.s32.totalorder %s183, %s186
      %p195 = scmp.eq.s32.totalorder %s26, 1
      %p196 = por %p194, %p195
      %p197 = scmp.ne.s32.totalorder %s186, %s187
      %p198 = scmp.eq.s32.totalorder %s26, 0
      %p199 = por %p197, %p198
      %p200 = scmp.ne.s32.totalorder %s186, %s187
      %p201 = scmp.eq.s32.totalorder %s27, 1
      %p202 = por %p200, %p201
      %p204 = scmp.ne.s32.totalorder %s187, %s203
      %p205 = scmp.eq.s32.totalorder %s27, 0
      %p206 = por %p204, %p205
      %p207 = scmp.le.s32.totalorder 1, %s21
      %p208 = scmp.lt.s32.totalorder %s21, 3
      %p209 = pnand %p207, %p208
      %p210 = pneg %p209
      // Predicated region
      $region9: #{tpu_custom_call.1} parent=5 // pred_check
        _
      $region10: #{tpu_custom_call.1} parent=5 // pred_check_branch
        %212 = sbr.rel (%p209) target = $region12
      $region11: #{tpu_custom_call.1} parent=5 // pred_region
        %s213 = ssub.s32 %s21, 1
        // Predicated region
        $region13: #{tpu_custom_call.1} parent=11 // pred_check
          %p214 = pneg %p68
        $region14: #{tpu_custom_call.1} parent=11 // pred_check_branch
          %216 = sbr.rel (%p214) target = $region16
        $region15: #{tpu_custom_call.1} parent=11 // pred_region
          %218 = vsyncadd [#allocation6], 0
          %s220 = sshll.u32 %s1, 4
          %s221 = int_to_ptr.hbm [resolvable:$true] %s220
          %s222 = sshll.u32 [#allocation5], 4
          %s223 = int_to_ptr.vmem [resolvable:$true] %s222
          %225 = dma.hbm_to_vmem [thread:$0]  %s221, 16, %s223, [#allocation6]
        $region16: #{tpu_custom_call.1} parent=11 // pred_fallthru
          _
        // Predicated region
        $region17: #{tpu_custom_call.1} parent=11 // pred_check
          %p226 = pneg %p89
        $region18: #{tpu_custom_call.1} parent=11 // pred_check_branch
          %228 = sbr.rel (%p226) target = $region20
        $region19: #{tpu_custom_call.1} parent=11 // pred_region
          _
        $region20: #{tpu_custom_call.1} parent=11 // pred_fallthru
          _
        // Predicated region
        $region21: #{tpu_custom_call.1} parent=11 // pred_check
          %p229 = pneg %p110
        $region22: #{tpu_custom_call.1} parent=11 // pred_check_branch
          %231 = sbr.rel (%p229) target = $region24
        $region23: #{tpu_custom_call.1} parent=11 // pred_region
          %233 = vsyncadd [#allocation6], 0
          %s234 = sshll.u32 %s3, 4
          %s235 = int_to_ptr.hbm [resolvable:$true] %s234
          %s236 = sshll.u32 [#allocation7], 4
          %s237 = int_to_ptr.vmem [resolvable:$true] %s236
          %242 = dma.hbm_to_vmem [thread:$0]  %s235, 4096, %s237, [#allocation6], 256, 256, 16
        $region24: #{tpu_custom_call.1} parent=11 // pred_fallthru
          _
        // Predicated region
        $region25: #{tpu_custom_call.1} parent=11 // pred_check
          %p243 = pneg %p131
        $region26: #{tpu_custom_call.1} parent=11 // pred_check_branch
          %245 = sbr.rel (%p243) target = $region28
        $region27: #{tpu_custom_call.1} parent=11 // pred_region
          _
        $region28: #{tpu_custom_call.1} parent=11 // pred_fallthru
          _
        // Predicated region
        $region29: #{tpu_custom_call.1} parent=11 // pred_check
          %p246 = pneg %p152
        $region30: #{tpu_custom_call.1} parent=11 // pred_check_branch
          %248 = sbr.rel (%p246) target = $region32
        $region31: #{tpu_custom_call.1} parent=11 // pred_region
          %250 = vsyncadd [#allocation9], 0
          %s251 = sshll.u32 %s5, 4
          %s252 = int_to_ptr.hbm [resolvable:$true] %s251
          %s253 = sshll.u32 [#allocation8], 4
          %s254 = int_to_ptr.vmem [resolvable:$true] %s253
          %259 = dma.hbm_to_vmem [thread:$0]  %s252, 4096, %s254, [#allocation9], 128, 128, 8
        $region32: #{tpu_custom_call.1} parent=11 // pred_fallthru
          _
        // Predicated region
        $region33: #{tpu_custom_call.1} parent=11 // pred_check
          %p260 = pneg %p173
        $region34: #{tpu_custom_call.1} parent=11 // pred_check_branch
          %262 = sbr.rel (%p260) target = $region36
        $region35: #{tpu_custom_call.1} parent=11 // pred_region
          _
        $region36: #{tpu_custom_call.1} parent=11 // pred_fallthru
          _
      $region12: #{tpu_custom_call.1} parent=5 // pred_fallthru
        _
      %p263 = scmp.lt.s32.totalorder %s21, 2
      // Predicated region
      $region37: #{tpu_custom_call.1} parent=5 // pred_check
        %p264 = pneg %p263
      $region38: #{tpu_custom_call.1} parent=5 // pred_check_branch
        %266 = sbr.rel (%p264) target = $region40
      $region39: #{tpu_custom_call.1} parent=5 // pred_region
        // Predicated region
        $region41: #{tpu_custom_call.1} parent=39 // pred_check
          %p267 = pneg %p41
        $region42: #{tpu_custom_call.1} parent=39 // pred_check_branch
          %269 = sbr.rel (%p267) target = $region44
        $region43: #{tpu_custom_call.1} parent=39 // pred_region
          %s270 = sand.u32 %s31, 1
          %s271 = scalar_lea.sflag [#allocation3], %s270
          %s272 = sand.u32 %s31, 1
          %s273 = smul.addr %s272, 152
          %s274 = scalar_lea.vmem [#allocation2], %s273
          %s275 = smul.u32 19, %s21
          %277 = vsyncadd %s271, 0
          %s278 = smul.addr %s275, 8
          %s279 = scalar_lea.hbm %s0, %s278
          %s280 = sshll.u32 %s279, 4
          %s281 = int_to_ptr.hbm [resolvable:$true] %s280
          %s282 = sshll.u32 %s274, 4
          %s283 = int_to_ptr.vmem [resolvable:$true] %s282
          %288 = dma.hbm_to_vmem [thread:$0]  %s281, 2432, %s283, %s271, 128, 128, 8
        $region44: #{tpu_custom_call.1} parent=39 // pred_fallthru
          _
      $region40: #{tpu_custom_call.1} parent=5 // pred_fallthru
        _
      %p289 = scmp.le.s32.totalorder 1, %s21
      %p290 = scmp.lt.s32.totalorder %s21, 3
      %p291 = pnand %p289, %p290
      %p292 = pneg %p291
      // Predicated region
      $region45: #{tpu_custom_call.1} parent=5 // pred_check
        _
      $region46: #{tpu_custom_call.1} parent=5 // pred_check_branch
        %294 = sbr.rel (%p291) target = $region48
      $region47: #{tpu_custom_call.1} parent=5 // pred_region
        %s295 = ssub.s32 %s21, 1
        %s296 = sand.u32 %s34, 1
        %s297 = scalar_lea.sflag [#allocation3], %s296
        %s298 = sand.u32 %s34, 1
        %s299 = smul.addr %s298, 152
        %s300 = scalar_lea.vmem [#allocation2], %s299
        // Predicated region
        $region49: #{tpu_custom_call.1} parent=47 // pred_check
          %p301 = pneg %p47
        $region50: #{tpu_custom_call.1} parent=47 // pred_check_branch
          %303 = sbr.rel (%p301) target = $region52
        $region51: #{tpu_custom_call.1} parent=47 // pred_region
          %305 = dma.done %s297, 2432
        $region52: #{tpu_custom_call.1} parent=47 // pred_fallthru
          _
        // Predicated region
        $region53: #{tpu_custom_call.1} parent=47 // pred_check
          %p306 = pneg %p68
        $region54: #{tpu_custom_call.1} parent=47 // pred_check_branch
          %308 = sbr.rel (%p306) target = $region56
        $region55: #{tpu_custom_call.1} parent=47 // pred_region
          %310 = dma.done [#allocation6], 16
        $region56: #{tpu_custom_call.1} parent=47 // pred_fallthru
          _
        // Predicated region
        $region57: #{tpu_custom_call.1} parent=47 // pred_check
          %p311 = pneg %p110
        $region58: #{tpu_custom_call.1} parent=47 // pred_check_branch
          %313 = sbr.rel (%p311) target = $region60
        $region59: #{tpu_custom_call.1} parent=47 // pred_region
          %315 = dma.done [#allocation6], 4096
        $region60: #{tpu_custom_call.1} parent=47 // pred_fallthru
          _
        // Predicated region
        $region61: #{tpu_custom_call.1} parent=47 // pred_check
          %p316 = pneg %p152
        $region62: #{tpu_custom_call.1} parent=47 // pred_check_branch
          %318 = sbr.rel (%p316) target = $region64
        $region63: #{tpu_custom_call.1} parent=47 // pred_region
          %320 = dma.done [#allocation9], 4096
        $region64: #{tpu_custom_call.1} parent=47 // pred_fallthru
          _
        %s321 = sand.u32 %s34, 1
        %s322 = scalar_lea.sflag [#allocation3], %s321
        %s323 = sand.u32 %s34, 1
        %s324 = smul.addr %s323, 152
        %s325 = scalar_lea.vmem [#allocation2], %s324
        %p326 = pneg %p47
        %p327 = pneg %p44
        %p328 = pneg %p68
        %p329 = pneg %p65
        %p330 = pneg %p89
        %p331 = pneg %p86
        %p332 = pneg %p110
        %p333 = pneg %p107
        %p334 = pneg %p131
        %p335 = pneg %p128
        %p336 = pneg %p152
        %p337 = pneg %p149
        %p338 = pneg %p173
        %p339 = pneg %p170
        %p340 = pneg %p199
        %p341 = pneg %p196
        %s342 = sand.u32 %s186, 1
        %s343 = scalar_lea.sflag [#allocation4], %s342
        %s344 = sand.u32 %s186, 1
        %s345 = smul.addr %s344, 152
        %s346 = scalar_lea.vmem [#allocation10], %s345
        %s347 = smul.u32 19, %s26
        %s348 = smul.u32 19, %s26
        %v349 = vld [vmem:[%s300] sm:$0xff]
        %v350 = vld [vmem:[%s300 + $0x8] sm:$0xff]
        %v351 = vld [vmem:[%s300 + $0x10] sm:$0xff]
        %v352 = vld [vmem:[%s300 + $0x18] sm:$0xff]
        %v353 = vld [vmem:[%s300 + $0x20] sm:$0xff]
        %v354 = vld [vmem:[%s300 + $0x28] sm:$0xff]
        %v355 = vld [vmem:[%s300 + $0x30] sm:$0xff]
        %v356 = vld [vmem:[%s300 + $0x38] sm:$0xff]
        %v357 = vld [vmem:[%s300 + $0x40] sm:$0xff]
        %v358 = vld [vmem:[%s300 + $0x48] sm:$0xff]
        %v359 = vld [vmem:[%s300 + $0x50] sm:$0xff]
        %v360 = vld [vmem:[%s300 + $0x58] sm:$0xff]
        %v361 = vld [vmem:[%s300 + $0x60] sm:$0xff]
        %v362 = vld [vmem:[%s300 + $0x68] sm:$0xff]
        %v363 = vld [vmem:[%s300 + $0x70] sm:$0xff]
        %v364 = vld [vmem:[%s300 + $0x78] sm:$0xff]
        %v365 = vld [vmem:[%s300 + $0x80] sm:$0xff]
        %v366 = vld [vmem:[%s300 + $0x88] sm:$0xff]
        %v367 = vld [vmem:[%s300 + $0x90] sm:$0xff]
        %368 = vadd.xlane.f32.xlu0 %v349
        %v369 = vpop.xlane.xlu0 %368
        %370 = vadd.xlane.f32.xlu0 %v350
        %v371 = vpop.xlane.xlu0 %370
        %372 = vadd.xlane.f32.xlu0 %v351
        %v373 = vpop.xlane.xlu0 %372
        %374 = vadd.xlane.f32.xlu0 %v352
        %v375 = vpop.xlane.xlu0 %374
        %376 = vadd.xlane.f32.xlu0 %v353
        %v377 = vpop.xlane.xlu0 %376
        %378 = vadd.xlane.f32.xlu0 %v354
        %v379 = vpop.xlane.xlu0 %378
        %380 = vadd.xlane.f32.xlu0 %v355
        %v381 = vpop.xlane.xlu0 %380
        %382 = vadd.xlane.f32.xlu0 %v356
        %v383 = vpop.xlane.xlu0 %382
        %384 = vadd.xlane.f32.xlu0 %v357
        %v385 = vpop.xlane.xlu0 %384
        %386 = vadd.xlane.f32.xlu0 %v358
        %v387 = vpop.xlane.xlu0 %386
        %388 = vadd.xlane.f32.xlu0 %v359
        %v389 = vpop.xlane.xlu0 %388
        %390 = vadd.xlane.f32.xlu0 %v360
        %v391 = vpop.xlane.xlu0 %390
        %392 = vadd.xlane.f32.xlu0 %v361
        %v393 = vpop.xlane.xlu0 %392
        %394 = vadd.xlane.f32.xlu0 %v362
        %v395 = vpop.xlane.xlu0 %394
        %396 = vadd.xlane.f32.xlu0 %v363
        %v397 = vpop.xlane.xlu0 %396
        %398 = vadd.xlane.f32.xlu0 %v364
        %v399 = vpop.xlane.xlu0 %398
        %400 = vadd.xlane.f32.xlu0 %v365
        %v401 = vpop.xlane.xlu0 %400
        %402 = vadd.xlane.f32.xlu0 %v366
        %v403 = vpop.xlane.xlu0 %402
        %404 = vadd.xlane.f32.xlu0 %v367
        %v405 = vpop.xlane.xlu0 %404
        %v406 = vrcp.pop 128.0
        %v407 = vmul.f32 128.0, %v406
        %v408 = vsub.f32 1.0, %v407
        %v409 = vmul.f32 %v406, %v408
        %v410 = vadd.f32 %v406, %v409
        %vm411 = vweird.f32 %v406
        %v412 = vsel %vm411, %v406, %v410
        %v413 = vmul.f32 %v369, %v412
        %v414 = vmul.f32 %v371, %v412
        %v415 = vmul.f32 %v373, %v412
        %v416 = vmul.f32 %v375, %v412
        %v417 = vmul.f32 %v377, %v412
        %v418 = vmul.f32 %v379, %v412
        %v419 = vmul.f32 %v381, %v412
        %v420 = vmul.f32 %v383, %v412
        %v421 = vmul.f32 %v385, %v412
        %v422 = vmul.f32 %v387, %v412
        %v423 = vmul.f32 %v389, %v412
        %v424 = vmul.f32 %v391, %v412
        %v425 = vmul.f32 %v393, %v412
        %v426 = vmul.f32 %v395, %v412
        %v427 = vmul.f32 %v397, %v412
        %v428 = vmul.f32 %v399, %v412
        %v429 = vmul.f32 %v401, %v412
        %v430 = vmul.f32 %v403, %v412
        %v431 = vmul.f32 %v405, %v412
        %v432 = vsub.f32 %v349, %v413
        %v433 = vsub.f32 %v350, %v414
        %v434 = vsub.f32 %v351, %v415
        %v435 = vsub.f32 %v352, %v416
        %v436 = vsub.f32 %v353, %v417
        %v437 = vsub.f32 %v354, %v418
        %v438 = vsub.f32 %v355, %v419
        %v439 = vsub.f32 %v356, %v420
        %v440 = vsub.f32 %v357, %v421
        %v441 = vsub.f32 %v358, %v422
        %v442 = vsub.f32 %v359, %v423
        %v443 = vsub.f32 %v360, %v424
        %v444 = vsub.f32 %v361, %v425
        %v445 = vsub.f32 %v362, %v426
        %v446 = vsub.f32 %v363, %v427
        %v447 = vsub.f32 %v364, %v428
        %v448 = vsub.f32 %v365, %v429
        %v449 = vsub.f32 %v366, %v430
        %v450 = vsub.f32 %v367, %v431
        %v451 = vmul.f32 %v432, %v432
        %v452 = vmul.f32 %v433, %v433
        %v453 = vmul.f32 %v434, %v434
        %v454 = vmul.f32 %v435, %v435
        %v455 = vmul.f32 %v436, %v436
        %v456 = vmul.f32 %v437, %v437
        %v457 = vmul.f32 %v438, %v438
        %v458 = vmul.f32 %v439, %v439
        %v459 = vmul.f32 %v440, %v440
        %v460 = vmul.f32 %v441, %v441
        %v461 = vmul.f32 %v442, %v442
        %v462 = vmul.f32 %v443, %v443
        %v463 = vmul.f32 %v444, %v444
        %v464 = vmul.f32 %v445, %v445
        %v465 = vmul.f32 %v446, %v446
        %v466 = vmul.f32 %v447, %v447
        %v467 = vmul.f32 %v448, %v448
        %v468 = vmul.f32 %v449, %v449
        %v469 = vmul.f32 %v450, %v450
        %470 = vadd.xlane.f32.xlu0 %v451
        %v471 = vpop.xlane.xlu0 %470
        %472 = vadd.xlane.f32.xlu0 %v452
        %v473 = vpop.xlane.xlu0 %472
        %474 = vadd.xlane.f32.xlu0 %v453
        %v475 = vpop.xlane.xlu0 %474
        %476 = vadd.xlane.f32.xlu0 %v454
        %v477 = vpop.xlane.xlu0 %476
        %478 = vadd.xlane.f32.xlu0 %v455
        %v479 = vpop.xlane.xlu0 %478
        %480 = vadd.xlane.f32.xlu0 %v456
        %v481 = vpop.xlane.xlu0 %480
        %482 = vadd.xlane.f32.xlu0 %v457
        %v483 = vpop.xlane.xlu0 %482
        %484 = vadd.xlane.f32.xlu0 %v458
        %v485 = vpop.xlane.xlu0 %484
        %486 = vadd.xlane.f32.xlu0 %v459
        %v487 = vpop.xlane.xlu0 %486
        %488 = vadd.xlane.f32.xlu0 %v460
        %v489 = vpop.xlane.xlu0 %488
        %490 = vadd.xlane.f32.xlu0 %v461
        %v491 = vpop.xlane.xlu0 %490
        %492 = vadd.xlane.f32.xlu0 %v462
        %v493 = vpop.xlane.xlu0 %492
        %494 = vadd.xlane.f32.xlu0 %v463
        %v495 = vpop.xlane.xlu0 %494
        %496 = vadd.xlane.f32.xlu0 %v464
        %v497 = vpop.xlane.xlu0 %496
        %498 = vadd.xlane.f32.xlu0 %v465
        %v499 = vpop.xlane.xlu0 %498
        %500 = vadd.xlane.f32.xlu0 %v466
        %v501 = vpop.xlane.xlu0 %500
        %502 = vadd.xlane.f32.xlu0 %v467
        %v503 = vpop.xlane.xlu0 %502
        %504 = vadd.xlane.f32.xlu0 %v468
        %v505 = vpop.xlane.xlu0 %504
        %506 = vadd.xlane.f32.xlu0 %v469
        %v507 = vpop.xlane.xlu0 %506
        %v508 = vmul.f32 %v471, %v412
        %v509 = vmul.f32 %v473, %v412
        %v510 = vmul.f32 %v475, %v412
        %v511 = vmul.f32 %v477, %v412
        %v512 = vmul.f32 %v479, %v412
        %v513 = vmul.f32 %v481, %v412
        %v514 = vmul.f32 %v483, %v412
        %v515 = vmul.f32 %v485, %v412
        %v516 = vmul.f32 %v487, %v412
        %v517 = vmul.f32 %v489, %v412
        %v518 = vmul.f32 %v491, %v412
        %v519 = vmul.f32 %v493, %v412
        %v520 = vmul.f32 %v495, %v412
        %v521 = vmul.f32 %v497, %v412
        %v522 = vmul.f32 %v499, %v412
        %v523 = vmul.f32 %v501, %v412
        %v524 = vmul.f32 %v503, %v412
        %v525 = vmul.f32 %v505, %v412
        %v526 = vmul.f32 %v507, %v412
        %v527 = vadd.f32 %v508, 1e-05
        %v528 = vadd.f32 %v509, 1e-05
        %v529 = vadd.f32 %v510, 1e-05
        %v530 = vadd.f32 %v511, 1e-05
        %v531 = vadd.f32 %v512, 1e-05
        %v532 = vadd.f32 %v513, 1e-05
        %v533 = vadd.f32 %v514, 1e-05
        %v534 = vadd.f32 %v515, 1e-05
        %v535 = vadd.f32 %v516, 1e-05
        %v536 = vadd.f32 %v517, 1e-05
        %v537 = vadd.f32 %v518, 1e-05
        %v538 = vadd.f32 %v519, 1e-05
        %v539 = vadd.f32 %v520, 1e-05
        %v540 = vadd.f32 %v521, 1e-05
        %v541 = vadd.f32 %v522, 1e-05
        %v542 = vadd.f32 %v523, 1e-05
        %v543 = vadd.f32 %v524, 1e-05
        %v544 = vadd.f32 %v525, 1e-05
        %v545 = vadd.f32 %v526, 1e-05
        %v546 = vrsqrt.pop %v527
        %v547 = vmul.f32 %v546, %v527
        %v548 = vmul.f32 %v547, %v546
        %v549 = vmul.f32 0.5, %v548
        %v550 = vsub.f32 1.5, %v549
        %v551 = vmul.f32 %v546, %v550
        %vm552 = vweird.f32 %v527
        %vm553 = vweird.f32 %v546
        %vm554 = vmor %vm552, %vm553
        %v555 = vsel %vm554, %v546, %v551
        %v556 = vrsqrt.pop %v528
        %v557 = vmul.f32 %v556, %v528
        %v558 = vmul.f32 %v557, %v556
        %v559 = vmul.f32 0.5, %v558
        %v560 = vsub.f32 1.5, %v559
        %v561 = vmul.f32 %v556, %v560
        %vm562 = vweird.f32 %v528
        %vm563 = vweird.f32 %v556
        %vm564 = vmor %vm562, %vm563
        %v565 = vsel %vm564, %v556, %v561
        %v566 = vrsqrt.pop %v529
        %v567 = vmul.f32 %v566, %v529
        %v568 = vmul.f32 %v567, %v566
        %v569 = vmul.f32 0.5, %v568
        %v570 = vsub.f32 1.5, %v569
        %v571 = vmul.f32 %v566, %v570
        %vm572 = vweird.f32 %v529
        %vm573 = vweird.f32 %v566
        %vm574 = vmor %vm572, %vm573
        %v575 = vsel %vm574, %v566, %v571
        %v576 = vrsqrt.pop %v530
        %v577 = vmul.f32 %v576, %v530
        %v578 = vmul.f32 %v577, %v576
        %v579 = vmul.f32 0.5, %v578
        %v580 = vsub.f32 1.5, %v579
        %v581 = vmul.f32 %v576, %v580
        %vm582 = vweird.f32 %v530
        %vm583 = vweird.f32 %v576
        %vm584 = vmor %vm582, %vm583
        %v585 = vsel %vm584, %v576, %v581
        %v586 = vrsqrt.pop %v531
        %v587 = vmul.f32 %v586, %v531
        %v588 = vmul.f32 %v587, %v586
        %v589 = vmul.f32 0.5, %v588
        %v590 = vsub.f32 1.5, %v589
        %v591 = vmul.f32 %v586, %v590
        %vm592 = vweird.f32 %v531
        %vm593 = vweird.f32 %v586
        %vm594 = vmor %vm592, %vm593
        %v595 = vsel %vm594, %v586, %v591
        %v596 = vrsqrt.pop %v532
        %v597 = vmul.f32 %v596, %v532
        %v598 = vmul.f32 %v597, %v596
        %v599 = vmul.f32 0.5, %v598
        %v600 = vsub.f32 1.5, %v599
        %v601 = vmul.f32 %v596, %v600
        %vm602 = vweird.f32 %v532
        %vm603 = vweird.f32 %v596
        %vm604 = vmor %vm602, %vm603
        %v605 = vsel %vm604, %v596, %v601
        %v606 = vrsqrt.pop %v533
        %v607 = vmul.f32 %v606, %v533
        %v608 = vmul.f32 %v607, %v606
        %v609 = vmul.f32 0.5, %v608
        %v610 = vsub.f32 1.5, %v609
        %v611 = vmul.f32 %v606, %v610
        %vm612 = vweird.f32 %v533
        %vm613 = vweird.f32 %v606
        %vm614 = vmor %vm612, %vm613
        %v615 = vsel %vm614, %v606, %v611
        %v616 = vrsqrt.pop %v534
        %v617 = vmul.f32 %v616, %v534
        %v618 = vmul.f32 %v617, %v616
        %v619 = vmul.f32 0.5, %v618
        %v620 = vsub.f32 1.5, %v619
        %v621 = vmul.f32 %v616, %v620
        %vm622 = vweird.f32 %v534
        %vm623 = vweird.f32 %v616
        %vm624 = vmor %vm622, %vm623
        %v625 = vsel %vm624, %v616, %v621
        %v626 = vrsqrt.pop %v535
        %v627 = vmul.f32 %v626, %v535
        %v628 = vmul.f32 %v627, %v626
        %v629 = vmul.f32 0.5, %v628
        %v630 = vsub.f32 1.5, %v629
        %v631 = vmul.f32 %v626, %v630
        %vm632 = vweird.f32 %v535
        %vm633 = vweird.f32 %v626
        %vm634 = vmor %vm632, %vm633
        %v635 = vsel %vm634, %v626, %v631
        %v636 = vrsqrt.pop %v536
        %v637 = vmul.f32 %v636, %v536
        %v638 = vmul.f32 %v637, %v636
        %v639 = vmul.f32 0.5, %v638
        %v640 = vsub.f32 1.5, %v639
        %v641 = vmul.f32 %v636, %v640
        %vm642 = vweird.f32 %v536
        %vm643 = vweird.f32 %v636
        %vm644 = vmor %vm642, %vm643
        %v645 = vsel %vm644, %v636, %v641
        %v646 = vrsqrt.pop %v537
        %v647 = vmul.f32 %v646, %v537
        %v648 = vmul.f32 %v647, %v646
        %v649 = vmul.f32 0.5, %v648
        %v650 = vsub.f32 1.5, %v649
        %v651 = vmul.f32 %v646, %v650
        %vm652 = vweird.f32 %v537
        %vm653 = vweird.f32 %v646
        %vm654 = vmor %vm652, %vm653
        %v655 = vsel %vm654, %v646, %v651
        %v656 = vrsqrt.pop %v538
        %v657 = vmul.f32 %v656, %v538
        %v658 = vmul.f32 %v657, %v656
        %v659 = vmul.f32 0.5, %v658
        %v660 = vsub.f32 1.5, %v659
        %v661 = vmul.f32 %v656, %v660
        %vm662 = vweird.f32 %v538
        %vm663 = vweird.f32 %v656
        %vm664 = vmor %vm662, %vm663
        %v665 = vsel %vm664, %v656, %v661
        %v666 = vrsqrt.pop %v539
        %v667 = vmul.f32 %v666, %v539
        %v668 = vmul.f32 %v667, %v666
        %v669 = vmul.f32 0.5, %v668
        %v670 = vsub.f32 1.5, %v669
        %v671 = vmul.f32 %v666, %v670
        %vm672 = vweird.f32 %v539
        %vm673 = vweird.f32 %v666
        %vm674 = vmor %vm672, %vm673
        %v675 = vsel %vm674, %v666, %v671
        %v676 = vrsqrt.pop %v540
        %v677 = vmul.f32 %v676, %v540
        %v678 = vmul.f32 %v677, %v676
        %v679 = vmul.f32 0.5, %v678
        %v680 = vsub.f32 1.5, %v679
        %v681 = vmul.f32 %v676, %v680
        %vm682 = vweird.f32 %v540
        %vm683 = vweird.f32 %v676
        %vm684 = vmor %vm682, %vm683
        %v685 = vsel %vm684, %v676, %v681
        %v686 = vrsqrt.pop %v541
        %v687 = vmul.f32 %v686, %v541
        %v688 = vmul.f32 %v687, %v686
        %v689 = vmul.f32 0.5, %v688
        %v690 = vsub.f32 1.5, %v689
        %v691 = vmul.f32 %v686, %v690
        %vm692 = vweird.f32 %v541
        %vm693 = vweird.f32 %v686
        %vm694 = vmor %vm692, %vm693
        %v695 = vsel %vm694, %v686, %v691
        %v696 = vrsqrt.pop %v542
        %v697 = vmul.f32 %v696, %v542
        %v698 = vmul.f32 %v697, %v696
        %v699 = vmul.f32 0.5, %v698
        %v700 = vsub.f32 1.5, %v699
        %v701 = vmul.f32 %v696, %v700
        %vm702 = vweird.f32 %v542
        %vm703 = vweird.f32 %v696
        %vm704 = vmor %vm702, %vm703
        %v705 = vsel %vm704, %v696, %v701
        %v706 = vrsqrt.pop %v543
        %v707 = vmul.f32 %v706, %v543
        %v708 = vmul.f32 %v707, %v706
        %v709 = vmul.f32 0.5, %v708
        %v710 = vsub.f32 1.5, %v709
        %v711 = vmul.f32 %v706, %v710
        %vm712 = vweird.f32 %v543
        %vm713 = vweird.f32 %v706
        %vm714 = vmor %vm712, %vm713
        %v715 = vsel %vm714, %v706, %v711
        %v716 = vrsqrt.pop %v544
        %v717 = vmul.f32 %v716, %v544
        %v718 = vmul.f32 %v717, %v716
        %v719 = vmul.f32 0.5, %v718
        %v720 = vsub.f32 1.5, %v719
        %v721 = vmul.f32 %v716, %v720
        %vm722 = vweird.f32 %v544
        %vm723 = vweird.f32 %v716
        %vm724 = vmor %vm722, %vm723
        %v725 = vsel %vm724, %v716, %v721
        %v726 = vrsqrt.pop %v545
        %v727 = vmul.f32 %v726, %v545
        %v728 = vmul.f32 %v727, %v726
        %v729 = vmul.f32 0.5, %v728
        %v730 = vsub.f32 1.5, %v729
        %v731 = vmul.f32 %v726, %v730
        %vm732 = vweird.f32 %v545
        %vm733 = vweird.f32 %v726
        %vm734 = vmor %vm732, %vm733
        %v735 = vsel %vm734, %v726, %v731
        %v736 = vld [vmem:[#allocation5] sm:$0x1]
        %v737 = vld [vmem:[%s2] sm:$0x1]
        %v739 = vperm.slane %v736, 0
        %v741 = vmul.f32 %v555, %v739
        %v742 = vmul.f32 %v565, %v739
        %v743 = vmul.f32 %v575, %v739
        %v744 = vmul.f32 %v585, %v739
        %v745 = vmul.f32 %v595, %v739
        %v746 = vmul.f32 %v605, %v739
        %v747 = vmul.f32 %v615, %v739
        %v748 = vmul.f32 %v625, %v739
        %v749 = vmul.f32 %v635, %v739
        %v750 = vmul.f32 %v645, %v739
        %v751 = vmul.f32 %v655, %v739
        %v752 = vmul.f32 %v665, %v739
        %v753 = vmul.f32 %v675, %v739
        %v754 = vmul.f32 %v685, %v739
        %v755 = vmul.f32 %v695, %v739
        %v756 = vmul.f32 %v705, %v739
        %v757 = vmul.f32 %v715, %v739
        %v758 = vmul.f32 %v725, %v739
        %v759 = vmul.f32 %v735, %v739
        %v760 = vmul.f32 %v432, %v741
        %v761 = vmul.f32 %v433, %v742
        %v762 = vmul.f32 %v434, %v743
        %v763 = vmul.f32 %v435, %v744
        %v764 = vmul.f32 %v436, %v745
        %v765 = vmul.f32 %v437, %v746
        %v766 = vmul.f32 %v438, %v747
        %v767 = vmul.f32 %v439, %v748
        %v768 = vmul.f32 %v440, %v749
        %v769 = vmul.f32 %v441, %v750
        %v770 = vmul.f32 %v442, %v751
        %v771 = vmul.f32 %v443, %v752
        %v772 = vmul.f32 %v444, %v753
        %v773 = vmul.f32 %v445, %v754
        %v774 = vmul.f32 %v446, %v755
        %v775 = vmul.f32 %v447, %v756
        %v776 = vmul.f32 %v448, %v757
        %v777 = vmul.f32 %v449, %v758
        %v778 = vmul.f32 %v450, %v759
        %v780 = vperm.slane %v737, 0
        %v782 = vadd.f32 %v760, %v780
        %v783 = vadd.f32 %v761, %v780
        %v784 = vadd.f32 %v762, %v780
        %v785 = vadd.f32 %v763, %v780
        %v786 = vadd.f32 %v764, %v780
        %v787 = vadd.f32 %v765, %v780
        %v788 = vadd.f32 %v766, %v780
        %v789 = vadd.f32 %v767, %v780
        %v790 = vadd.f32 %v768, %v780
        %v791 = vadd.f32 %v769, %v780
        %v792 = vadd.f32 %v770, %v780
        %v793 = vadd.f32 %v771, %v780
        %v794 = vadd.f32 %v772, %v780
        %v795 = vadd.f32 %v773, %v780
        %v796 = vadd.f32 %v774, %v780
        %v797 = vadd.f32 %v775, %v780
        %v798 = vadd.f32 %v776, %v780
        %v799 = vadd.f32 %v777, %v780
        %v800 = vadd.f32 %v778, %v780
        %v801 = vld [vmem:[#allocation7] sm:$0xff]
        %v802 = vld [vmem:[#allocation7 + $0x8] sm:$0xff]
        %v803 = vld [vmem:[#allocation7 + $0x10] sm:$0xff]
        %v804 = vld [vmem:[#allocation7 + $0x18] sm:$0xff]
        %v805 = vld [vmem:[#allocation7 + $0x20] sm:$0xff]
        %v806 = vld [vmem:[#allocation7 + $0x28] sm:$0xff]
        %v807 = vld [vmem:[#allocation7 + $0x30] sm:$0xff]
        %v808 = vld [vmem:[#allocation7 + $0x38] sm:$0xff]
        %v809 = vld [vmem:[#allocation7 + $0x40] sm:$0xff]
        %v810 = vld [vmem:[#allocation7 + $0x48] sm:$0xff]
        %v811 = vld [vmem:[#allocation7 + $0x50] sm:$0xff]
        %v812 = vld [vmem:[#allocation7 + $0x58] sm:$0xff]
        %v813 = vld [vmem:[#allocation7 + $0x60] sm:$0xff]
        %v814 = vld [vmem:[#allocation7 + $0x68] sm:$0xff]
        %v815 = vld [vmem:[#allocation7 + $0x70] sm:$0xff]
        %v816 = vld [vmem:[#allocation7 + $0x78] sm:$0xff]
        %v817 = vld [vmem:[#allocation7 + $0x80] sm:$0xff]
        %v818 = vld [vmem:[#allocation7 + $0x88] sm:$0xff]
        %v819 = vld [vmem:[#allocation7 + $0x90] sm:$0xff]
        %v820 = vld [vmem:[#allocation7 + $0x98] sm:$0xff]
        %v821 = vld [vmem:[#allocation7 + $0xa0] sm:$0xff]
        %v822 = vld [vmem:[#allocation7 + $0xa8] sm:$0xff]
        %v823 = vld [vmem:[#allocation7 + $0xb0] sm:$0xff]
        %v824 = vld [vmem:[#allocation7 + $0xb8] sm:$0xff]
        %v825 = vld [vmem:[#allocation7 + $0xc0] sm:$0xff]
        %v826 = vld [vmem:[#allocation7 + $0xc8] sm:$0xff]
        %v827 = vld [vmem:[#allocation7 + $0xd0] sm:$0xff]
        %v828 = vld [vmem:[#allocation7 + $0xd8] sm:$0xff]
        %v829 = vld [vmem:[#allocation7 + $0xe0] sm:$0xff]
        %v830 = vld [vmem:[#allocation7 + $0xe8] sm:$0xff]
        %v831 = vld [vmem:[#allocation7 + $0xf0] sm:$0xff]
        %v832 = vld [vmem:[#allocation7 + $0xf8] sm:$0xff]
        %v833 = vld [vmem:[%s4] sm:$0x3]
        %v835 = vperm.slane %v833, 0
        %v836 = vperm.slane %v833, 1
        %839 = vmatpush.msra.mxu0 %v831
        %840 = vmatpush.msra.mxu0 %v829
        %841 = vmatpush.msra.mxu0 %v827
        %842 = vmatpush.msra.mxu0 %v825
        %843 = vmatpush.msra.mxu0 %v823
        %844 = vmatpush.msra.mxu0 %v821
        %845 = vmatpush.msra.mxu0 %v819
        %846 = vmatpush.msra.mxu0 %v817
        %847 = vmatpush.msra.mxu0 %v815
        %848 = vmatpush.msra.mxu0 %v813
        %849 = vmatpush.msra.mxu0 %v811
        %850 = vmatpush.msra.mxu0 %v809
        %851 = vmatpush.msra.mxu0 %v807
        %852 = vmatpush.msra.mxu0 %v805
        %853 = vmatpush.msra.mxu0 %v803
        %854 = vmatpush.msra.mxu0 %v801
        %855 = vmatmul.f32.gmra.mxu0 %v782
        %v856 = vpop.f32.mrf.mxu0
        %v857 = vadd.f32 %v835, %v856
        %858 = vmatmul.f32.gmra.mxu0 %v783
        %v859 = vpop.f32.mrf.mxu0
        %v860 = vadd.f32 %v835, %v859
        %861 = vmatmul.f32.gmra.mxu0 %v784
        %v862 = vpop.f32.mrf.mxu0
        %v863 = vadd.f32 %v835, %v862
        %864 = vmatmul.f32.gmra.mxu0 %v785
        %v865 = vpop.f32.mrf.mxu0
        %v866 = vadd.f32 %v835, %v865
        %867 = vmatmul.f32.gmra.mxu0 %v786
        %v868 = vpop.f32.mrf.mxu0
        %v869 = vadd.f32 %v835, %v868
        %870 = vmatmul.f32.gmra.mxu0 %v787
        %v871 = vpop.f32.mrf.mxu0
        %v872 = vadd.f32 %v835, %v871
        %873 = vmatmul.f32.gmra.mxu0 %v788
        %v874 = vpop.f32.mrf.mxu0
        %v875 = vadd.f32 %v835, %v874
        %876 = vmatmul.f32.gmra.mxu0 %v789
        %v877 = vpop.f32.mrf.mxu0
        %v878 = vadd.f32 %v835, %v877
        %879 = vmatmul.f32.gmra.mxu0 %v790
        %v880 = vpop.f32.mrf.mxu0
        %v881 = vadd.f32 %v835, %v880
        %882 = vmatmul.f32.gmra.mxu0 %v791
        %v883 = vpop.f32.mrf.mxu0
        %v884 = vadd.f32 %v835, %v883
        %885 = vmatmul.f32.gmra.mxu0 %v792
        %v886 = vpop.f32.mrf.mxu0
        %v887 = vadd.f32 %v835, %v886
        %888 = vmatmul.f32.gmra.mxu0 %v793
        %v889 = vpop.f32.mrf.mxu0
        %v890 = vadd.f32 %v835, %v889
        %891 = vmatmul.f32.gmra.mxu0 %v794
        %v892 = vpop.f32.mrf.mxu0
        %v893 = vadd.f32 %v835, %v892
        %894 = vmatmul.f32.gmra.mxu0 %v795
        %v895 = vpop.f32.mrf.mxu0
        %v896 = vadd.f32 %v835, %v895
        %897 = vmatmul.f32.gmra.mxu0 %v796
        %v898 = vpop.f32.mrf.mxu0
        %v899 = vadd.f32 %v835, %v898
        %900 = vmatmul.f32.gmra.mxu0 %v797
        %v901 = vpop.f32.mrf.mxu0
        %v902 = vadd.f32 %v835, %v901
        %903 = vmatmul.f32.gmra.mxu0 %v798
        %v904 = vpop.f32.mrf.mxu0
        %v905 = vadd.f32 %v835, %v904
        %906 = vmatmul.f32.gmra.mxu0 %v799
        %v907 = vpop.f32.mrf.mxu0
        %v908 = vadd.f32 %v835, %v907
        %909 = vmatmul.f32.gmra.mxu0 %v800
        %v910 = vpop.f32.mrf.mxu0
        %v911 = vadd.f32 %v835, %v910
        %912 = vdwg.mxu0
        %913 = vmatpush.msra.mxu0 %v832
        %914 = vmatpush.msra.mxu0 %v830
        %915 = vmatpush.msra.mxu0 %v828
        %916 = vmatpush.msra.mxu0 %v826
        %917 = vmatpush.msra.mxu0 %v824
        %918 = vmatpush.msra.mxu0 %v822
        %919 = vmatpush.msra.mxu0 %v820
        %920 = vmatpush.msra.mxu0 %v818
        %921 = vmatpush.msra.mxu0 %v816
        %922 = vmatpush.msra.mxu0 %v814
        %923 = vmatpush.msra.mxu0 %v812
        %924 = vmatpush.msra.mxu0 %v810
        %925 = vmatpush.msra.mxu0 %v808
        %926 = vmatpush.msra.mxu0 %v806
        %927 = vmatpush.msra.mxu0 %v804
        %928 = vmatpush.msra.mxu0 %v802
        %929 = vmatmul.f32.gmra.mxu0 %v782
        %v930 = vpop.f32.mrf.mxu0
        %v931 = vadd.f32 %v836, %v930
        %932 = vmatmul.f32.gmra.mxu0 %v783
        %v933 = vpop.f32.mrf.mxu0
        %v934 = vadd.f32 %v836, %v933
        %935 = vmatmul.f32.gmra.mxu0 %v784
        %v936 = vpop.f32.mrf.mxu0
        %v937 = vadd.f32 %v836, %v936
        %938 = vmatmul.f32.gmra.mxu0 %v785
        %v939 = vpop.f32.mrf.mxu0
        %v940 = vadd.f32 %v836, %v939
        %941 = vmatmul.f32.gmra.mxu0 %v786
        %v942 = vpop.f32.mrf.mxu0
        %v943 = vadd.f32 %v836, %v942
        %944 = vmatmul.f32.gmra.mxu0 %v787
        %v945 = vpop.f32.mrf.mxu0
        %v946 = vadd.f32 %v836, %v945
        %947 = vmatmul.f32.gmra.mxu0 %v788
        %v948 = vpop.f32.mrf.mxu0
        %v949 = vadd.f32 %v836, %v948
        %950 = vmatmul.f32.gmra.mxu0 %v789
        %v951 = vpop.f32.mrf.mxu0
        %v952 = vadd.f32 %v836, %v951
        %953 = vmatmul.f32.gmra.mxu0 %v790
        %v954 = vpop.f32.mrf.mxu0
        %v955 = vadd.f32 %v836, %v954
        %956 = vmatmul.f32.gmra.mxu0 %v791
        %v957 = vpop.f32.mrf.mxu0
        %v958 = vadd.f32 %v836, %v957
        %959 = vmatmul.f32.gmra.mxu0 %v792
        %v960 = vpop.f32.mrf.mxu0
        %v961 = vadd.f32 %v836, %v960
        %962 = vmatmul.f32.gmra.mxu0 %v793
        %v963 = vpop.f32.mrf.mxu0
        %v964 = vadd.f32 %v836, %v963
        %965 = vmatmul.f32.gmra.mxu0 %v794
        %v966 = vpop.f32.mrf.mxu0
        %v967 = vadd.f32 %v836, %v966
        %968 = vmatmul.f32.gmra.mxu0 %v795
        %v969 = vpop.f32.mrf.mxu0
        %v970 = vadd.f32 %v836, %v969
        %971 = vmatmul.f32.gmra.mxu0 %v796
        %v972 = vpop.f32.mrf.mxu0
        %v973 = vadd.f32 %v836, %v972
        %974 = vmatmul.f32.gmra.mxu0 %v797
        %v975 = vpop.f32.mrf.mxu0
        %v976 = vadd.f32 %v836, %v975
        %977 = vmatmul.f32.gmra.mxu0 %v798
        %v978 = vpop.f32.mrf.mxu0
        %v979 = vadd.f32 %v836, %v978
        %980 = vmatmul.f32.gmra.mxu0 %v799
        %v981 = vpop.f32.mrf.mxu0
        %v982 = vadd.f32 %v836, %v981
        %983 = vmatmul.f32.gmra.mxu0 %v800
        %v984 = vpop.f32.mrf.mxu0
        %v985 = vadd.f32 %v836, %v984
        %986 = vdwg.mxu0
        %v987 = vmul.f32 %v857, 0.5
        %v988 = vmul.f32 %v931, 0.5
        %v989 = vmul.f32 %v860, 0.5
        %v990 = vmul.f32 %v934, 0.5
        %v991 = vmul.f32 %v863, 0.5
        %v992 = vmul.f32 %v937, 0.5
        %v993 = vmul.f32 %v866, 0.5
        %v994 = vmul.f32 %v940, 0.5
        %v995 = vmul.f32 %v869, 0.5
        %v996 = vmul.f32 %v943, 0.5
        %v997 = vmul.f32 %v872, 0.5
        %v998 = vmul.f32 %v946, 0.5
        %v999 = vmul.f32 %v875, 0.5
        %v1000 = vmul.f32 %v949, 0.5
        %v1001 = vmul.f32 %v878, 0.5
        %v1002 = vmul.f32 %v952, 0.5
        %v1003 = vmul.f32 %v881, 0.5
        %v1004 = vmul.f32 %v955, 0.5
        %v1005 = vmul.f32 %v884, 0.5
        %v1006 = vmul.f32 %v958, 0.5
        %v1007 = vmul.f32 %v887, 0.5
        %v1008 = vmul.f32 %v961, 0.5
        %v1009 = vmul.f32 %v890, 0.5
        %v1010 = vmul.f32 %v964, 0.5
        %v1011 = vmul.f32 %v893, 0.5
        %v1012 = vmul.f32 %v967, 0.5
        %v1013 = vmul.f32 %v896, 0.5
        %v1014 = vmul.f32 %v970, 0.5
        %v1015 = vmul.f32 %v899, 0.5
        %v1016 = vmul.f32 %v973, 0.5
        %v1017 = vmul.f32 %v902, 0.5
        %v1018 = vmul.f32 %v976, 0.5
        %v1019 = vmul.f32 %v905, 0.5
        %v1020 = vmul.f32 %v979, 0.5
        %v1021 = vmul.f32 %v908, 0.5
        %v1022 = vmul.f32 %v982, 0.5
        %v1023 = vmul.f32 %v911, 0.5
        %v1024 = vmul.f32 %v985, 0.5
        %v1025 = vmul.f32 %v857, 0.70710677
        %v1026 = vmul.f32 %v931, 0.70710677
        %v1027 = vmul.f32 %v860, 0.70710677
        %v1028 = vmul.f32 %v934, 0.70710677
        %v1029 = vmul.f32 %v863, 0.70710677
        %v1030 = vmul.f32 %v937, 0.70710677
        %v1031 = vmul.f32 %v866, 0.70710677
        %v1032 = vmul.f32 %v940, 0.70710677
        %v1033 = vmul.f32 %v869, 0.70710677
        %v1034 = vmul.f32 %v943, 0.70710677
        %v1035 = vmul.f32 %v872, 0.70710677
        %v1036 = vmul.f32 %v946, 0.70710677
        %v1037 = vmul.f32 %v875, 0.70710677
        %v1038 = vmul.f32 %v949, 0.70710677
        %v1039 = vmul.f32 %v878, 0.70710677
        %v1040 = vmul.f32 %v952, 0.70710677
        %v1041 = vmul.f32 %v881, 0.70710677
        %v1042 = vmul.f32 %v955, 0.70710677
        %v1043 = vmul.f32 %v884, 0.70710677
        %v1044 = vmul.f32 %v958, 0.70710677
        %v1045 = vmul.f32 %v887, 0.70710677
        %v1046 = vmul.f32 %v961, 0.70710677
        %v1047 = vmul.f32 %v890, 0.70710677
        %v1048 = vmul.f32 %v964, 0.70710677
        %v1049 = vmul.f32 %v893, 0.70710677
        %v1050 = vmul.f32 %v967, 0.70710677
        %v1051 = vmul.f32 %v896, 0.70710677
        %v1052 = vmul.f32 %v970, 0.70710677
        %v1053 = vmul.f32 %v899, 0.70710677
        %v1054 = vmul.f32 %v973, 0.70710677
        %v1055 = vmul.f32 %v902, 0.70710677
        %v1056 = vmul.f32 %v976, 0.70710677
        %v1057 = vmul.f32 %v905, 0.70710677
        %v1058 = vmul.f32 %v979, 0.70710677
        %v1059 = vmul.f32 %v908, 0.70710677
        %v1060 = vmul.f32 %v982, 0.70710677
        %v1061 = vmul.f32 %v911, 0.70710677
        %v1062 = vmul.f32 %v985, 0.70710677
        %v1063 = vmul.f32 %v1025, %v1025
        %v1064 = vmin.f32 16.0, %v1063
        %v1065 = vmul.f32 %v1064, 2.1237322e-06
        %v1066 = vadd.f32 %v1065, 0.00028619796
        %v1067 = vmul.f32 %v1064, %v1066
        %v1068 = vadd.f32 %v1067, 0.0036580483
        %v1069 = vmul.f32 %v1064, %v1068
        %v1070 = vadd.f32 %v1069, 0.05243302
        %v1071 = vmul.f32 %v1064, %v1070
        %v1072 = vadd.f32 %v1071, 0.18741608
        %v1073 = vmul.f32 %v1064, %v1072
        %v1074 = vadd.f32 %v1073, 1.1283791
        %v1075 = vmul.f32 %v1025, %v1074
        %v1076 = vmul.f32 %v1064, 3.8918573e-05
        %v1077 = vadd.f32 %v1076, 0.001143296
        %v1078 = vmul.f32 %v1064, %v1077
        %v1079 = vadd.f32 %v1078, 0.014752088
        %v1080 = vmul.f32 %v1064, %v1079
        %v1081 = vadd.f32 %v1080, 0.112945676
        %v1082 = vmul.f32 %v1064, %v1081
        %v1083 = vadd.f32 %v1082, 0.4994258
        %v1084 = vmul.f32 %v1064, %v1083
        %v1085 = vadd.f32 %v1084, 1.0
        %v1086 = vrcp.pop %v1085
        %v1087 = vmul.f32 %v1085, %v1086
        %v1088 = vsub.f32 1.0, %v1087
        %v1089 = vmul.f32 %v1086, %v1088
        %v1090 = vadd.f32 %v1086, %v1089
        %vm1091 = vweird.f32 %v1085
        %vm1092 = vweird.f32 %v1086
        %vm1093 = vmor %vm1091, %vm1092
        %v1094 = vsel %vm1093, %v1086, %v1090
        %v1095 = vand.u32 2147483647, %v1085
        %vm1096 = vcmp.eq.f32.partialorder %v1095, 8.507059e+37
        %v1097 = vand.u32 %v1085, 2147483648
        %v1098 = vor.u32 1.1754944e-38, %v1097
        %v1099 = vsel %vm1096, %v1098, %v1094
        %v1100 = vmul.f32 %v1075, %v1099
        %v1101 = vmin.f32 %v1100, 1.0
        %v1102 = vmax.f32 %v1101, -1.0
        %v1103 = vmul.f32 %v1026, %v1026
        %v1104 = vmin.f32 16.0, %v1103
        %v1105 = vmul.f32 %v1104, 2.1237322e-06
        %v1106 = vadd.f32 %v1105, 0.00028619796
        %v1107 = vmul.f32 %v1104, %v1106
        %v1108 = vadd.f32 %v1107, 0.0036580483
        %v1109 = vmul.f32 %v1104, %v1108
        %v1110 = vadd.f32 %v1109, 0.05243302
        %v1111 = vmul.f32 %v1104, %v1110
        %v1112 = vadd.f32 %v1111, 0.18741608
        %v1113 = vmul.f32 %v1104, %v1112
        %v1114 = vadd.f32 %v1113, 1.1283791
        %v1115 = vmul.f32 %v1026, %v1114
        %v1116 = vmul.f32 %v1104, 3.8918573e-05
        %v1117 = vadd.f32 %v1116, 0.001143296
        %v1118 = vmul.f32 %v1104, %v1117
        %v1119 = vadd.f32 %v1118, 0.014752088
        %v1120 = vmul.f32 %v1104, %v1119
        %v1121 = vadd.f32 %v1120, 0.112945676
        %v1122 = vmul.f32 %v1104, %v1121
        %v1123 = vadd.f32 %v1122, 0.4994258
        %v1124 = vmul.f32 %v1104, %v1123
        %v1125 = vadd.f32 %v1124, 1.0
        %v1126 = vrcp.pop %v1125
        %v1127 = vmul.f32 %v1125, %v1126
        %v1128 = vsub.f32 1.0, %v1127
        %v1129 = vmul.f32 %v1126, %v1128
        %v1130 = vadd.f32 %v1126, %v1129
        %vm1131 = vweird.f32 %v1125
        %vm1132 = vweird.f32 %v1126
        %vm1133 = vmor %vm1131, %vm1132
        %v1134 = vsel %vm1133, %v1126, %v1130
        %v1135 = vand.u32 2147483647, %v1125
        %vm1136 = vcmp.eq.f32.partialorder %v1135, 8.507059e+37
        %v1137 = vand.u32 %v1125, 2147483648
        %v1138 = vor.u32 1.1754944e-38, %v1137
        %v1139 = vsel %vm1136, %v1138, %v1134
        %v1140 = vmul.f32 %v1115, %v1139
        %v1141 = vmin.f32 %v1140, 1.0
        %v1142 = vmax.f32 %v1141, -1.0
        %v1143 = vmul.f32 %v1027, %v1027
        %v1144 = vmin.f32 16.0, %v1143
        %v1145 = vmul.f32 %v1144, 2.1237322e-06
        %v1146 = vadd.f32 %v1145, 0.00028619796
        %v1147 = vmul.f32 %v1144, %v1146
        %v1148 = vadd.f32 %v1147, 0.0036580483
        %v1149 = vmul.f32 %v1144, %v1148
        %v1150 = vadd.f32 %v1149, 0.05243302
        %v1151 = vmul.f32 %v1144, %v1150
        %v1152 = vadd.f32 %v1151, 0.18741608
        %v1153 = vmul.f32 %v1144, %v1152
        %v1154 = vadd.f32 %v1153, 1.1283791
        %v1155 = vmul.f32 %v1027, %v1154
        %v1156 = vmul.f32 %v1144, 3.8918573e-05
        %v1157 = vadd.f32 %v1156, 0.001143296
        %v1158 = vmul.f32 %v1144, %v1157
        %v1159 = vadd.f32 %v1158, 0.014752088
        %v1160 = vmul.f32 %v1144, %v1159
        %v1161 = vadd.f32 %v1160, 0.112945676
        %v1162 = vmul.f32 %v1144, %v1161
        %v1163 = vadd.f32 %v1162, 0.4994258
        %v1164 = vmul.f32 %v1144, %v1163
        %v1165 = vadd.f32 %v1164, 1.0
        %v1166 = vrcp.pop %v1165
        %v1167 = vmul.f32 %v1165, %v1166
        %v1168 = vsub.f32 1.0, %v1167
        %v1169 = vmul.f32 %v1166, %v1168
        %v1170 = vadd.f32 %v1166, %v1169
        %vm1171 = vweird.f32 %v1165
        %vm1172 = vweird.f32 %v1166
        %vm1173 = vmor %vm1171, %vm1172
        %v1174 = vsel %vm1173, %v1166, %v1170
        %v1175 = vand.u32 2147483647, %v1165
        %vm1176 = vcmp.eq.f32.partialorder %v1175, 8.507059e+37
        %v1177 = vand.u32 %v1165, 2147483648
        %v1178 = vor.u32 1.1754944e-38, %v1177
        %v1179 = vsel %vm1176, %v1178, %v1174
        %v1180 = vmul.f32 %v1155, %v1179
        %v1181 = vmin.f32 %v1180, 1.0
        %v1182 = vmax.f32 %v1181, -1.0
        %v1183 = vmul.f32 %v1028, %v1028
        %v1184 = vmin.f32 16.0, %v1183
        %v1185 = vmul.f32 %v1184, 2.1237322e-06
        %v1186 = vadd.f32 %v1185, 0.00028619796
        %v1187 = vmul.f32 %v1184, %v1186
        %v1188 = vadd.f32 %v1187, 0.0036580483
        %v1189 = vmul.f32 %v1184, %v1188
        %v1190 = vadd.f32 %v1189, 0.05243302
        %v1191 = vmul.f32 %v1184, %v1190
        %v1192 = vadd.f32 %v1191, 0.18741608
        %v1193 = vmul.f32 %v1184, %v1192
        %v1194 = vadd.f32 %v1193, 1.1283791
        %v1195 = vmul.f32 %v1028, %v1194
        %v1196 = vmul.f32 %v1184, 3.8918573e-05
        %v1197 = vadd.f32 %v1196, 0.001143296
        %v1198 = vmul.f32 %v1184, %v1197
        %v1199 = vadd.f32 %v1198, 0.014752088
        %v1200 = vmul.f32 %v1184, %v1199
        %v1201 = vadd.f32 %v1200, 0.112945676
        %v1202 = vmul.f32 %v1184, %v1201
        %v1203 = vadd.f32 %v1202, 0.4994258
        %v1204 = vmul.f32 %v1184, %v1203
        %v1205 = vadd.f32 %v1204, 1.0
        %v1206 = vrcp.pop %v1205
        %v1207 = vmul.f32 %v1205, %v1206
        %v1208 = vsub.f32 1.0, %v1207
        %v1209 = vmul.f32 %v1206, %v1208
        %v1210 = vadd.f32 %v1206, %v1209
        %vm1211 = vweird.f32 %v1205
        %vm1212 = vweird.f32 %v1206
        %vm1213 = vmor %vm1211, %vm1212
        %v1214 = vsel %vm1213, %v1206, %v1210
        %v1215 = vand.u32 2147483647, %v1205
        %vm1216 = vcmp.eq.f32.partialorder %v1215, 8.507059e+37
        %v1217 = vand.u32 %v1205, 2147483648
        %v1218 = vor.u32 1.1754944e-38, %v1217
        %v1219 = vsel %vm1216, %v1218, %v1214
        %v1220 = vmul.f32 %v1195, %v1219
        %v1221 = vmin.f32 %v1220, 1.0
        %v1222 = vmax.f32 %v1221, -1.0
        %v1223 = vmul.f32 %v1029, %v1029
        %v1224 = vmin.f32 16.0, %v1223
        %v1225 = vmul.f32 %v1224, 2.1237322e-06
        %v1226 = vadd.f32 %v1225, 0.00028619796
        %v1227 = vmul.f32 %v1224, %v1226
        %v1228 = vadd.f32 %v1227, 0.0036580483
        %v1229 = vmul.f32 %v1224, %v1228
        %v1230 = vadd.f32 %v1229, 0.05243302
        %v1231 = vmul.f32 %v1224, %v1230
        %v1232 = vadd.f32 %v1231, 0.18741608
        %v1233 = vmul.f32 %v1224, %v1232
        %v1234 = vadd.f32 %v1233, 1.1283791
        %v1235 = vmul.f32 %v1029, %v1234
        %v1236 = vmul.f32 %v1224, 3.8918573e-05
        %v1237 = vadd.f32 %v1236, 0.001143296
        %v1238 = vmul.f32 %v1224, %v1237
        %v1239 = vadd.f32 %v1238, 0.014752088
        %v1240 = vmul.f32 %v1224, %v1239
        %v1241 = vadd.f32 %v1240, 0.112945676
        %v1242 = vmul.f32 %v1224, %v1241
        %v1243 = vadd.f32 %v1242, 0.4994258
        %v1244 = vmul.f32 %v1224, %v1243
        %v1245 = vadd.f32 %v1244, 1.0
        %v1246 = vrcp.pop %v1245
        %v1247 = vmul.f32 %v1245, %v1246
        %v1248 = vsub.f32 1.0, %v1247
        %v1249 = vmul.f32 %v1246, %v1248
        %v1250 = vadd.f32 %v1246, %v1249
        %vm1251 = vweird.f32 %v1245
        %vm1252 = vweird.f32 %v1246
        %vm1253 = vmor %vm1251, %vm1252
        %v1254 = vsel %vm1253, %v1246, %v1250
        %v1255 = vand.u32 2147483647, %v1245
        %vm1256 = vcmp.eq.f32.partialorder %v1255, 8.507059e+37
        %v1257 = vand.u32 %v1245, 2147483648
        %v1258 = vor.u32 1.1754944e-38, %v1257
        %v1259 = vsel %vm1256, %v1258, %v1254
        %v1260 = vmul.f32 %v1235, %v1259
        %v1261 = vmin.f32 %v1260, 1.0
        %v1262 = vmax.f32 %v1261, -1.0
        %v1263 = vmul.f32 %v1030, %v1030
        %v1264 = vmin.f32 16.0, %v1263
        %v1265 = vmul.f32 %v1264, 2.1237322e-06
        %v1266 = vadd.f32 %v1265, 0.00028619796
        %v1267 = vmul.f32 %v1264, %v1266
        %v1268 = vadd.f32 %v1267, 0.0036580483
        %v1269 = vmul.f32 %v1264, %v1268
        %v1270 = vadd.f32 %v1269, 0.05243302
        %v1271 = vmul.f32 %v1264, %v1270
        %v1272 = vadd.f32 %v1271, 0.18741608
        %v1273 = vmul.f32 %v1264, %v1272
        %v1274 = vadd.f32 %v1273, 1.1283791
        %v1275 = vmul.f32 %v1030, %v1274
        %v1276 = vmul.f32 %v1264, 3.8918573e-05
        %v1277 = vadd.f32 %v1276, 0.001143296
        %v1278 = vmul.f32 %v1264, %v1277
        %v1279 = vadd.f32 %v1278, 0.014752088
        %v1280 = vmul.f32 %v1264, %v1279
        %v1281 = vadd.f32 %v1280, 0.112945676
        %v1282 = vmul.f32 %v1264, %v1281
        %v1283 = vadd.f32 %v1282, 0.4994258
        %v1284 = vmul.f32 %v1264, %v1283
        %v1285 = vadd.f32 %v1284, 1.0
        %v1286 = vrcp.pop %v1285
        %v1287 = vmul.f32 %v1285, %v1286
        %v1288 = vsub.f32 1.0, %v1287
        %v1289 = vmul.f32 %v1286, %v1288
        %v1290 = vadd.f32 %v1286, %v1289
        %vm1291 = vweird.f32 %v1285
        %vm1292 = vweird.f32 %v1286
        %vm1293 = vmor %vm1291, %vm1292
        %v1294 = vsel %vm1293, %v1286, %v1290
        %v1295 = vand.u32 2147483647, %v1285
        %vm1296 = vcmp.eq.f32.partialorder %v1295, 8.507059e+37
        %v1297 = vand.u32 %v1285, 2147483648
        %v1298 = vor.u32 1.1754944e-38, %v1297
        %v1299 = vsel %vm1296, %v1298, %v1294
        %v1300 = vmul.f32 %v1275, %v1299
        %v1301 = vmin.f32 %v1300, 1.0
        %v1302 = vmax.f32 %v1301, -1.0
        %v1303 = vmul.f32 %v1031, %v1031
        %v1304 = vmin.f32 16.0, %v1303
        %v1305 = vmul.f32 %v1304, 2.1237322e-06
        %v1306 = vadd.f32 %v1305, 0.00028619796
        %v1307 = vmul.f32 %v1304, %v1306
        %v1308 = vadd.f32 %v1307, 0.0036580483
        %v1309 = vmul.f32 %v1304, %v1308
        %v1310 = vadd.f32 %v1309, 0.05243302
        %v1311 = vmul.f32 %v1304, %v1310
        %v1312 = vadd.f32 %v1311, 0.18741608
        %v1313 = vmul.f32 %v1304, %v1312
        %v1314 = vadd.f32 %v1313, 1.1283791
        %v1315 = vmul.f32 %v1031, %v1314
        %v1316 = vmul.f32 %v1304, 3.8918573e-05
        %v1317 = vadd.f32 %v1316, 0.001143296
        %v1318 = vmul.f32 %v1304, %v1317
        %v1319 = vadd.f32 %v1318, 0.014752088
        %v1320 = vmul.f32 %v1304, %v1319
        %v1321 = vadd.f32 %v1320, 0.112945676
        %v1322 = vmul.f32 %v1304, %v1321
        %v1323 = vadd.f32 %v1322, 0.4994258
        %v1324 = vmul.f32 %v1304, %v1323
        %v1325 = vadd.f32 %v1324, 1.0
        %v1326 = vrcp.pop %v1325
        %v1327 = vmul.f32 %v1325, %v1326
        %v1328 = vsub.f32 1.0, %v1327
        %v1329 = vmul.f32 %v1326, %v1328
        %v1330 = vadd.f32 %v1326, %v1329
        %vm1331 = vweird.f32 %v1325
        %vm1332 = vweird.f32 %v1326
        %vm1333 = vmor %vm1331, %vm1332
        %v1334 = vsel %vm1333, %v1326, %v1330
        %v1335 = vand.u32 2147483647, %v1325
        %vm1336 = vcmp.eq.f32.partialorder %v1335, 8.507059e+37
        %v1337 = vand.u32 %v1325, 2147483648
        %v1338 = vor.u32 1.1754944e-38, %v1337
        %v1339 = vsel %vm1336, %v1338, %v1334
        %v1340 = vmul.f32 %v1315, %v1339
        %v1341 = vmin.f32 %v1340, 1.0
        %v1342 = vmax.f32 %v1341, -1.0
        %v1343 = vmul.f32 %v1032, %v1032
        %v1344 = vmin.f32 16.0, %v1343
        %v1345 = vmul.f32 %v1344, 2.1237322e-06
        %v1346 = vadd.f32 %v1345, 0.00028619796
        %v1347 = vmul.f32 %v1344, %v1346
        %v1348 = vadd.f32 %v1347, 0.0036580483
        %v1349 = vmul.f32 %v1344, %v1348
        %v1350 = vadd.f32 %v1349, 0.05243302
        %v1351 = vmul.f32 %v1344, %v1350
        %v1352 = vadd.f32 %v1351, 0.18741608
        %v1353 = vmul.f32 %v1344, %v1352
        %v1354 = vadd.f32 %v1353, 1.1283791
        %v1355 = vmul.f32 %v1032, %v1354
        %v1356 = vmul.f32 %v1344, 3.8918573e-05
        %v1357 = vadd.f32 %v1356, 0.001143296
        %v1358 = vmul.f32 %v1344, %v1357
        %v1359 = vadd.f32 %v1358, 0.014752088
        %v1360 = vmul.f32 %v1344, %v1359
        %v1361 = vadd.f32 %v1360, 0.112945676
        %v1362 = vmul.f32 %v1344, %v1361
        %v1363 = vadd.f32 %v1362, 0.4994258
        %v1364 = vmul.f32 %v1344, %v1363
        %v1365 = vadd.f32 %v1364, 1.0
        %v1366 = vrcp.pop %v1365
        %v1367 = vmul.f32 %v1365, %v1366
        %v1368 = vsub.f32 1.0, %v1367
        %v1369 = vmul.f32 %v1366, %v1368
        %v1370 = vadd.f32 %v1366, %v1369
        %vm1371 = vweird.f32 %v1365
        %vm1372 = vweird.f32 %v1366
        %vm1373 = vmor %vm1371, %vm1372
        %v1374 = vsel %vm1373, %v1366, %v1370
        %v1375 = vand.u32 2147483647, %v1365
        %vm1376 = vcmp.eq.f32.partialorder %v1375, 8.507059e+37
        %v1377 = vand.u32 %v1365, 2147483648
        %v1378 = vor.u32 1.1754944e-38, %v1377
        %v1379 = vsel %vm1376, %v1378, %v1374
        %v1380 = vmul.f32 %v1355, %v1379
        %v1381 = vmin.f32 %v1380, 1.0
        %v1382 = vmax.f32 %v1381, -1.0
        %v1383 = vmul.f32 %v1033, %v1033
        %v1384 = vmin.f32 16.0, %v1383
        %v1385 = vmul.f32 %v1384, 2.1237322e-06
        %v1386 = vadd.f32 %v1385, 0.00028619796
        %v1387 = vmul.f32 %v1384, %v1386
        %v1388 = vadd.f32 %v1387, 0.0036580483
        %v1389 = vmul.f32 %v1384, %v1388
        %v1390 = vadd.f32 %v1389, 0.05243302
        %v1391 = vmul.f32 %v1384, %v1390
        %v1392 = vadd.f32 %v1391, 0.18741608
        %v1393 = vmul.f32 %v1384, %v1392
        %v1394 = vadd.f32 %v1393, 1.1283791
        %v1395 = vmul.f32 %v1033, %v1394
        %v1396 = vmul.f32 %v1384, 3.8918573e-05
        %v1397 = vadd.f32 %v1396, 0.001143296
        %v1398 = vmul.f32 %v1384, %v1397
        %v1399 = vadd.f32 %v1398, 0.014752088
        %v1400 = vmul.f32 %v1384, %v1399
        %v1401 = vadd.f32 %v1400, 0.112945676
        %v1402 = vmul.f32 %v1384, %v1401
        %v1403 = vadd.f32 %v1402, 0.4994258
        %v1404 = vmul.f32 %v1384, %v1403
        %v1405 = vadd.f32 %v1404, 1.0
        %v1406 = vrcp.pop %v1405
        %v1407 = vmul.f32 %v1405, %v1406
        %v1408 = vsub.f32 1.0, %v1407
        %v1409 = vmul.f32 %v1406, %v1408
        %v1410 = vadd.f32 %v1406, %v1409
        %vm1411 = vweird.f32 %v1405
        %vm1412 = vweird.f32 %v1406
        %vm1413 = vmor %vm1411, %vm1412
        %v1414 = vsel %vm1413, %v1406, %v1410
        %v1415 = vand.u32 2147483647, %v1405
        %vm1416 = vcmp.eq.f32.partialorder %v1415, 8.507059e+37
        %v1417 = vand.u32 %v1405, 2147483648
        %v1418 = vor.u32 1.1754944e-38, %v1417
        %v1419 = vsel %vm1416, %v1418, %v1414
        %v1420 = vmul.f32 %v1395, %v1419
        %v1421 = vmin.f32 %v1420, 1.0
        %v1422 = vmax.f32 %v1421, -1.0
        %v1423 = vmul.f32 %v1034, %v1034
        %v1424 = vmin.f32 16.0, %v1423
        %v1425 = vmul.f32 %v1424, 2.1237322e-06
        %v1426 = vadd.f32 %v1425, 0.00028619796
        %v1427 = vmul.f32 %v1424, %v1426
        %v1428 = vadd.f32 %v1427, 0.0036580483
        %v1429 = vmul.f32 %v1424, %v1428
        %v1430 = vadd.f32 %v1429, 0.05243302
        %v1431 = vmul.f32 %v1424, %v1430
        %v1432 = vadd.f32 %v1431, 0.18741608
        %v1433 = vmul.f32 %v1424, %v1432
        %v1434 = vadd.f32 %v1433, 1.1283791
        %v1435 = vmul.f32 %v1034, %v1434
        %v1436 = vmul.f32 %v1424, 3.8918573e-05
        %v1437 = vadd.f32 %v1436, 0.001143296
        %v1438 = vmul.f32 %v1424, %v1437
        %v1439 = vadd.f32 %v1438, 0.014752088
        %v1440 = vmul.f32 %v1424, %v1439
        %v1441 = vadd.f32 %v1440, 0.112945676
        %v1442 = vmul.f32 %v1424, %v1441
        %v1443 = vadd.f32 %v1442, 0.4994258
        %v1444 = vmul.f32 %v1424, %v1443
        %v1445 = vadd.f32 %v1444, 1.0
        %v1446 = vrcp.pop %v1445
        %v1447 = vmul.f32 %v1445, %v1446
        %v1448 = vsub.f32 1.0, %v1447
        %v1449 = vmul.f32 %v1446, %v1448
        %v1450 = vadd.f32 %v1446, %v1449
        %vm1451 = vweird.f32 %v1445
        %vm1452 = vweird.f32 %v1446
        %vm1453 = vmor %vm1451, %vm1452
        %v1454 = vsel %vm1453, %v1446, %v1450
        %v1455 = vand.u32 2147483647, %v1445
        %vm1456 = vcmp.eq.f32.partialorder %v1455, 8.507059e+37
        %v1457 = vand.u32 %v1445, 2147483648
        %v1458 = vor.u32 1.1754944e-38, %v1457
        %v1459 = vsel %vm1456, %v1458, %v1454
        %v1460 = vmul.f32 %v1435, %v1459
        %v1461 = vmin.f32 %v1460, 1.0
        %v1462 = vmax.f32 %v1461, -1.0
        %v1463 = vmul.f32 %v1035, %v1035
        %v1464 = vmin.f32 16.0, %v1463
        %v1465 = vmul.f32 %v1464, 2.1237322e-06
        %v1466 = vadd.f32 %v1465, 0.00028619796
        %v1467 = vmul.f32 %v1464, %v1466
        %v1468 = vadd.f32 %v1467, 0.0036580483
        %v1469 = vmul.f32 %v1464, %v1468
        %v1470 = vadd.f32 %v1469, 0.05243302
        %v1471 = vmul.f32 %v1464, %v1470
        %v1472 = vadd.f32 %v1471, 0.18741608
        %v1473 = vmul.f32 %v1464, %v1472
        %v1474 = vadd.f32 %v1473, 1.1283791
        %v1475 = vmul.f32 %v1035, %v1474
        %v1476 = vmul.f32 %v1464, 3.8918573e-05
        %v1477 = vadd.f32 %v1476, 0.001143296
        %v1478 = vmul.f32 %v1464, %v1477
        %v1479 = vadd.f32 %v1478, 0.014752088
        %v1480 = vmul.f32 %v1464, %v1479
        %v1481 = vadd.f32 %v1480, 0.112945676
        %v1482 = vmul.f32 %v1464, %v1481
        %v1483 = vadd.f32 %v1482, 0.4994258
        %v1484 = vmul.f32 %v1464, %v1483
        %v1485 = vadd.f32 %v1484, 1.0
        %v1486 = vrcp.pop %v1485
        %v1487 = vmul.f32 %v1485, %v1486
        %v1488 = vsub.f32 1.0, %v1487
        %v1489 = vmul.f32 %v1486, %v1488
        %v1490 = vadd.f32 %v1486, %v1489
        %vm1491 = vweird.f32 %v1485
        %vm1492 = vweird.f32 %v1486
        %vm1493 = vmor %vm1491, %vm1492
        %v1494 = vsel %vm1493, %v1486, %v1490
        %v1495 = vand.u32 2147483647, %v1485
        %vm1496 = vcmp.eq.f32.partialorder %v1495, 8.507059e+37
        %v1497 = vand.u32 %v1485, 2147483648
        %v1498 = vor.u32 1.1754944e-38, %v1497
        %v1499 = vsel %vm1496, %v1498, %v1494
        %v1500 = vmul.f32 %v1475, %v1499
        %v1501 = vmin.f32 %v1500, 1.0
        %v1502 = vmax.f32 %v1501, -1.0
        %v1503 = vmul.f32 %v1036, %v1036
        %v1504 = vmin.f32 16.0, %v1503
        %v1505 = vmul.f32 %v1504, 2.1237322e-06
        %v1506 = vadd.f32 %v1505, 0.00028619796
        %v1507 = vmul.f32 %v1504, %v1506
        %v1508 = vadd.f32 %v1507, 0.0036580483
        %v1509 = vmul.f32 %v1504, %v1508
        %v1510 = vadd.f32 %v1509, 0.05243302
        %v1511 = vmul.f32 %v1504, %v1510
        %v1512 = vadd.f32 %v1511, 0.18741608
        %v1513 = vmul.f32 %v1504, %v1512
        %v1514 = vadd.f32 %v1513, 1.1283791
        %v1515 = vmul.f32 %v1036, %v1514
        %v1516 = vmul.f32 %v1504, 3.8918573e-05
        %v1517 = vadd.f32 %v1516, 0.001143296
        %v1518 = vmul.f32 %v1504, %v1517
        %v1519 = vadd.f32 %v1518, 0.014752088
        %v1520 = vmul.f32 %v1504, %v1519
        %v1521 = vadd.f32 %v1520, 0.112945676
        %v1522 = vmul.f32 %v1504, %v1521
        %v1523 = vadd.f32 %v1522, 0.4994258
        %v1524 = vmul.f32 %v1504, %v1523
        %v1525 = vadd.f32 %v1524, 1.0
        %v1526 = vrcp.pop %v1525
        %v1527 = vmul.f32 %v1525, %v1526
        %v1528 = vsub.f32 1.0, %v1527
        %v1529 = vmul.f32 %v1526, %v1528
        %v1530 = vadd.f32 %v1526, %v1529
        %vm1531 = vweird.f32 %v1525
        %vm1532 = vweird.f32 %v1526
        %vm1533 = vmor %vm1531, %vm1532
        %v1534 = vsel %vm1533, %v1526, %v1530
        %v1535 = vand.u32 2147483647, %v1525
        %vm1536 = vcmp.eq.f32.partialorder %v1535, 8.507059e+37
        %v1537 = vand.u32 %v1525, 2147483648
        %v1538 = vor.u32 1.1754944e-38, %v1537
        %v1539 = vsel %vm1536, %v1538, %v1534
        %v1540 = vmul.f32 %v1515, %v1539
        %v1541 = vmin.f32 %v1540, 1.0
        %v1542 = vmax.f32 %v1541, -1.0
        %v1543 = vmul.f32 %v1037, %v1037
        %v1544 = vmin.f32 16.0, %v1543
        %v1545 = vmul.f32 %v1544, 2.1237322e-06
        %v1546 = vadd.f32 %v1545, 0.00028619796
        %v1547 = vmul.f32 %v1544, %v1546
        %v1548 = vadd.f32 %v1547, 0.0036580483
        %v1549 = vmul.f32 %v1544, %v1548
        %v1550 = vadd.f32 %v1549, 0.05243302
        %v1551 = vmul.f32 %v1544, %v1550
        %v1552 = vadd.f32 %v1551, 0.18741608
        %v1553 = vmul.f32 %v1544, %v1552
        %v1554 = vadd.f32 %v1553, 1.1283791
        %v1555 = vmul.f32 %v1037, %v1554
        %v1556 = vmul.f32 %v1544, 3.8918573e-05
        %v1557 = vadd.f32 %v1556, 0.001143296
        %v1558 = vmul.f32 %v1544, %v1557
        %v1559 = vadd.f32 %v1558, 0.014752088
        %v1560 = vmul.f32 %v1544, %v1559
        %v1561 = vadd.f32 %v1560, 0.112945676
        %v1562 = vmul.f32 %v1544, %v1561
        %v1563 = vadd.f32 %v1562, 0.4994258
        %v1564 = vmul.f32 %v1544, %v1563
        %v1565 = vadd.f32 %v1564, 1.0
        %v1566 = vrcp.pop %v1565
        %v1567 = vmul.f32 %v1565, %v1566
        %v1568 = vsub.f32 1.0, %v1567
        %v1569 = vmul.f32 %v1566, %v1568
        %v1570 = vadd.f32 %v1566, %v1569
        %vm1571 = vweird.f32 %v1565
        %vm1572 = vweird.f32 %v1566
        %vm1573 = vmor %vm1571, %vm1572
        %v1574 = vsel %vm1573, %v1566, %v1570
        %v1575 = vand.u32 2147483647, %v1565
        %vm1576 = vcmp.eq.f32.partialorder %v1575, 8.507059e+37
        %v1577 = vand.u32 %v1565, 2147483648
        %v1578 = vor.u32 1.1754944e-38, %v1577
        %v1579 = vsel %vm1576, %v1578, %v1574
        %v1580 = vmul.f32 %v1555, %v1579
        %v1581 = vmin.f32 %v1580, 1.0
        %v1582 = vmax.f32 %v1581, -1.0
        %v1583 = vmul.f32 %v1038, %v1038
        %v1584 = vmin.f32 16.0, %v1583
        %v1585 = vmul.f32 %v1584, 2.1237322e-06
        %v1586 = vadd.f32 %v1585, 0.00028619796
        %v1587 = vmul.f32 %v1584, %v1586
        %v1588 = vadd.f32 %v1587, 0.0036580483
        %v1589 = vmul.f32 %v1584, %v1588
        %v1590 = vadd.f32 %v1589, 0.05243302
        %v1591 = vmul.f32 %v1584, %v1590
        %v1592 = vadd.f32 %v1591, 0.18741608
        %v1593 = vmul.f32 %v1584, %v1592
        %v1594 = vadd.f32 %v1593, 1.1283791
        %v1595 = vmul.f32 %v1038, %v1594
        %v1596 = vmul.f32 %v1584, 3.8918573e-05
        %v1597 = vadd.f32 %v1596, 0.001143296
        %v1598 = vmul.f32 %v1584, %v1597
        %v1599 = vadd.f32 %v1598, 0.014752088
        %v1600 = vmul.f32 %v1584, %v1599
        %v1601 = vadd.f32 %v1600, 0.112945676
        %v1602 = vmul.f32 %v1584, %v1601
        %v1603 = vadd.f32 %v1602, 0.4994258
        %v1604 = vmul.f32 %v1584, %v1603
        %v1605 = vadd.f32 %v1604, 1.0
        %v1606 = vrcp.pop %v1605
        %v1607 = vmul.f32 %v1605, %v1606
        %v1608 = vsub.f32 1.0, %v1607
        %v1609 = vmul.f32 %v1606, %v1608
        %v1610 = vadd.f32 %v1606, %v1609
        %vm1611 = vweird.f32 %v1605
        %vm1612 = vweird.f32 %v1606
        %vm1613 = vmor %vm1611, %vm1612
        %v1614 = vsel %vm1613, %v1606, %v1610
        %v1615 = vand.u32 2147483647, %v1605
        %vm1616 = vcmp.eq.f32.partialorder %v1615, 8.507059e+37
        %v1617 = vand.u32 %v1605, 2147483648
        %v1618 = vor.u32 1.1754944e-38, %v1617
        %v1619 = vsel %vm1616, %v1618, %v1614
        %v1620 = vmul.f32 %v1595, %v1619
        %v1621 = vmin.f32 %v1620, 1.0
        %v1622 = vmax.f32 %v1621, -1.0
        %v1623 = vmul.f32 %v1039, %v1039
        %v1624 = vmin.f32 16.0, %v1623
        %v1625 = vmul.f32 %v1624, 2.1237322e-06
        %v1626 = vadd.f32 %v1625, 0.00028619796
        %v1627 = vmul.f32 %v1624, %v1626
        %v1628 = vadd.f32 %v1627, 0.0036580483
        %v1629 = vmul.f32 %v1624, %v1628
        %v1630 = vadd.f32 %v1629, 0.05243302
        %v1631 = vmul.f32 %v1624, %v1630
        %v1632 = vadd.f32 %v1631, 0.18741608
        %v1633 = vmul.f32 %v1624, %v1632
        %v1634 = vadd.f32 %v1633, 1.1283791
        %v1635 = vmul.f32 %v1039, %v1634
        %v1636 = vmul.f32 %v1624, 3.8918573e-05
        %v1637 = vadd.f32 %v1636, 0.001143296
        %v1638 = vmul.f32 %v1624, %v1637
        %v1639 = vadd.f32 %v1638, 0.014752088
        %v1640 = vmul.f32 %v1624, %v1639
        %v1641 = vadd.f32 %v1640, 0.112945676
        %v1642 = vmul.f32 %v1624, %v1641
        %v1643 = vadd.f32 %v1642, 0.4994258
        %v1644 = vmul.f32 %v1624, %v1643
        %v1645 = vadd.f32 %v1644, 1.0
        %v1646 = vrcp.pop %v1645
        %v1647 = vmul.f32 %v1645, %v1646
        %v1648 = vsub.f32 1.0, %v1647
        %v1649 = vmul.f32 %v1646, %v1648
        %v1650 = vadd.f32 %v1646, %v1649
        %vm1651 = vweird.f32 %v1645
        %vm1652 = vweird.f32 %v1646
        %vm1653 = vmor %vm1651, %vm1652
        %v1654 = vsel %vm1653, %v1646, %v1650
        %v1655 = vand.u32 2147483647, %v1645
        %vm1656 = vcmp.eq.f32.partialorder %v1655, 8.507059e+37
        %v1657 = vand.u32 %v1645, 2147483648
        %v1658 = vor.u32 1.1754944e-38, %v1657
        %v1659 = vsel %vm1656, %v1658, %v1654
        %v1660 = vmul.f32 %v1635, %v1659
        %v1661 = vmin.f32 %v1660, 1.0
        %v1662 = vmax.f32 %v1661, -1.0
        %v1663 = vmul.f32 %v1040, %v1040
        %v1664 = vmin.f32 16.0, %v1663
        %v1665 = vmul.f32 %v1664, 2.1237322e-06
        %v1666 = vadd.f32 %v1665, 0.00028619796
        %v1667 = vmul.f32 %v1664, %v1666
        %v1668 = vadd.f32 %v1667, 0.0036580483
        %v1669 = vmul.f32 %v1664, %v1668
        %v1670 = vadd.f32 %v1669, 0.05243302
        %v1671 = vmul.f32 %v1664, %v1670
        %v1672 = vadd.f32 %v1671, 0.18741608
        %v1673 = vmul.f32 %v1664, %v1672
        %v1674 = vadd.f32 %v1673, 1.1283791
        %v1675 = vmul.f32 %v1040, %v1674
        %v1676 = vmul.f32 %v1664, 3.8918573e-05
        %v1677 = vadd.f32 %v1676, 0.001143296
        %v1678 = vmul.f32 %v1664, %v1677
        %v1679 = vadd.f32 %v1678, 0.014752088
        %v1680 = vmul.f32 %v1664, %v1679
        %v1681 = vadd.f32 %v1680, 0.112945676
        %v1682 = vmul.f32 %v1664, %v1681
        %v1683 = vadd.f32 %v1682, 0.4994258
        %v1684 = vmul.f32 %v1664, %v1683
        %v1685 = vadd.f32 %v1684, 1.0
        %v1686 = vrcp.pop %v1685
        %v1687 = vmul.f32 %v1685, %v1686
        %v1688 = vsub.f32 1.0, %v1687
        %v1689 = vmul.f32 %v1686, %v1688
        %v1690 = vadd.f32 %v1686, %v1689
        %vm1691 = vweird.f32 %v1685
        %vm1692 = vweird.f32 %v1686
        %vm1693 = vmor %vm1691, %vm1692
        %v1694 = vsel %vm1693, %v1686, %v1690
        %v1695 = vand.u32 2147483647, %v1685
        %vm1696 = vcmp.eq.f32.partialorder %v1695, 8.507059e+37
        %v1697 = vand.u32 %v1685, 2147483648
        %v1698 = vor.u32 1.1754944e-38, %v1697
        %v1699 = vsel %vm1696, %v1698, %v1694
        %v1700 = vmul.f32 %v1675, %v1699
        %v1701 = vmin.f32 %v1700, 1.0
        %v1702 = vmax.f32 %v1701, -1.0
        %v1703 = vmul.f32 %v1041, %v1041
        %v1704 = vmin.f32 16.0, %v1703
        %v1705 = vmul.f32 %v1704, 2.1237322e-06
        %v1706 = vadd.f32 %v1705, 0.00028619796
        %v1707 = vmul.f32 %v1704, %v1706
        %v1708 = vadd.f32 %v1707, 0.0036580483
        %v1709 = vmul.f32 %v1704, %v1708
        %v1710 = vadd.f32 %v1709, 0.05243302
        %v1711 = vmul.f32 %v1704, %v1710
        %v1712 = vadd.f32 %v1711, 0.18741608
        %v1713 = vmul.f32 %v1704, %v1712
        %v1714 = vadd.f32 %v1713, 1.1283791
        %v1715 = vmul.f32 %v1041, %v1714
        %v1716 = vmul.f32 %v1704, 3.8918573e-05
        %v1717 = vadd.f32 %v1716, 0.001143296
        %v1718 = vmul.f32 %v1704, %v1717
        %v1719 = vadd.f32 %v1718, 0.014752088
        %v1720 = vmul.f32 %v1704, %v1719
        %v1721 = vadd.f32 %v1720, 0.112945676
        %v1722 = vmul.f32 %v1704, %v1721
        %v1723 = vadd.f32 %v1722, 0.4994258
        %v1724 = vmul.f32 %v1704, %v1723
        %v1725 = vadd.f32 %v1724, 1.0
        %v1726 = vrcp.pop %v1725
        %v1727 = vmul.f32 %v1725, %v1726
        %v1728 = vsub.f32 1.0, %v1727
        %v1729 = vmul.f32 %v1726, %v1728
        %v1730 = vadd.f32 %v1726, %v1729
        %vm1731 = vweird.f32 %v1725
        %vm1732 = vweird.f32 %v1726
        %vm1733 = vmor %vm1731, %vm1732
        %v1734 = vsel %vm1733, %v1726, %v1730
        %v1735 = vand.u32 2147483647, %v1725
        %vm1736 = vcmp.eq.f32.partialorder %v1735, 8.507059e+37
        %v1737 = vand.u32 %v1725, 2147483648
        %v1738 = vor.u32 1.1754944e-38, %v1737
        %v1739 = vsel %vm1736, %v1738, %v1734
        %v1740 = vmul.f32 %v1715, %v1739
        %v1741 = vmin.f32 %v1740, 1.0
        %v1742 = vmax.f32 %v1741, -1.0
        %v1743 = vmul.f32 %v1042, %v1042
        %v1744 = vmin.f32 16.0, %v1743
        %v1745 = vmul.f32 %v1744, 2.1237322e-06
        %v1746 = vadd.f32 %v1745, 0.00028619796
        %v1747 = vmul.f32 %v1744, %v1746
        %v1748 = vadd.f32 %v1747, 0.0036580483
        %v1749 = vmul.f32 %v1744, %v1748
        %v1750 = vadd.f32 %v1749, 0.05243302
        %v1751 = vmul.f32 %v1744, %v1750
        %v1752 = vadd.f32 %v1751, 0.18741608
        %v1753 = vmul.f32 %v1744, %v1752
        %v1754 = vadd.f32 %v1753, 1.1283791
        %v1755 = vmul.f32 %v1042, %v1754
        %v1756 = vmul.f32 %v1744, 3.8918573e-05
        %v1757 = vadd.f32 %v1756, 0.001143296
        %v1758 = vmul.f32 %v1744, %v1757
        %v1759 = vadd.f32 %v1758, 0.014752088
        %v1760 = vmul.f32 %v1744, %v1759
        %v1761 = vadd.f32 %v1760, 0.112945676
        %v1762 = vmul.f32 %v1744, %v1761
        %v1763 = vadd.f32 %v1762, 0.4994258
        %v1764 = vmul.f32 %v1744, %v1763
        %v1765 = vadd.f32 %v1764, 1.0
        %v1766 = vrcp.pop %v1765
        %v1767 = vmul.f32 %v1765, %v1766
        %v1768 = vsub.f32 1.0, %v1767
        %v1769 = vmul.f32 %v1766, %v1768
        %v1770 = vadd.f32 %v1766, %v1769
        %vm1771 = vweird.f32 %v1765
        %vm1772 = vweird.f32 %v1766
        %vm1773 = vmor %vm1771, %vm1772
        %v1774 = vsel %vm1773, %v1766, %v1770
        %v1775 = vand.u32 2147483647, %v1765
        %vm1776 = vcmp.eq.f32.partialorder %v1775, 8.507059e+37
        %v1777 = vand.u32 %v1765, 2147483648
        %v1778 = vor.u32 1.1754944e-38, %v1777
        %v1779 = vsel %vm1776, %v1778, %v1774
        %v1780 = vmul.f32 %v1755, %v1779
        %v1781 = vmin.f32 %v1780, 1.0
        %v1782 = vmax.f32 %v1781, -1.0
        %v1783 = vmul.f32 %v1043, %v1043
        %v1784 = vmin.f32 16.0, %v1783
        %v1785 = vmul.f32 %v1784, 2.1237322e-06
        %v1786 = vadd.f32 %v1785, 0.00028619796
        %v1787 = vmul.f32 %v1784, %v1786
        %v1788 = vadd.f32 %v1787, 0.0036580483
        %v1789 = vmul.f32 %v1784, %v1788
        %v1790 = vadd.f32 %v1789, 0.05243302
        %v1791 = vmul.f32 %v1784, %v1790
        %v1792 = vadd.f32 %v1791, 0.18741608
        %v1793 = vmul.f32 %v1784, %v1792
        %v1794 = vadd.f32 %v1793, 1.1283791
        %v1795 = vmul.f32 %v1043, %v1794
        %v1796 = vmul.f32 %v1784, 3.8918573e-05
        %v1797 = vadd.f32 %v1796, 0.001143296
        %v1798 = vmul.f32 %v1784, %v1797
        %v1799 = vadd.f32 %v1798, 0.014752088
        %v1800 = vmul.f32 %v1784, %v1799
        %v1801 = vadd.f32 %v1800, 0.112945676
        %v1802 = vmul.f32 %v1784, %v1801
        %v1803 = vadd.f32 %v1802, 0.4994258
        %v1804 = vmul.f32 %v1784, %v1803
        %v1805 = vadd.f32 %v1804, 1.0
        %v1806 = vrcp.pop %v1805
        %v1807 = vmul.f32 %v1805, %v1806
        %v1808 = vsub.f32 1.0, %v1807
        %v1809 = vmul.f32 %v1806, %v1808
        %v1810 = vadd.f32 %v1806, %v1809
        %vm1811 = vweird.f32 %v1805
        %vm1812 = vweird.f32 %v1806
        %vm1813 = vmor %vm1811, %vm1812
        %v1814 = vsel %vm1813, %v1806, %v1810
        %v1815 = vand.u32 2147483647, %v1805
        %vm1816 = vcmp.eq.f32.partialorder %v1815, 8.507059e+37
        %v1817 = vand.u32 %v1805, 2147483648
        %v1818 = vor.u32 1.1754944e-38, %v1817
        %v1819 = vsel %vm1816, %v1818, %v1814
        %v1820 = vmul.f32 %v1795, %v1819
        %v1821 = vmin.f32 %v1820, 1.0
        %v1822 = vmax.f32 %v1821, -1.0
        %v1823 = vmul.f32 %v1044, %v1044
        %v1824 = vmin.f32 16.0, %v1823
        %v1825 = vmul.f32 %v1824, 2.1237322e-06
        %v1826 = vadd.f32 %v1825, 0.00028619796
        %v1827 = vmul.f32 %v1824, %v1826
        %v1828 = vadd.f32 %v1827, 0.0036580483
        %v1829 = vmul.f32 %v1824, %v1828
        %v1830 = vadd.f32 %v1829, 0.05243302
        %v1831 = vmul.f32 %v1824, %v1830
        %v1832 = vadd.f32 %v1831, 0.18741608
        %v1833 = vmul.f32 %v1824, %v1832
        %v1834 = vadd.f32 %v1833, 1.1283791
        %v1835 = vmul.f32 %v1044, %v1834
        %v1836 = vmul.f32 %v1824, 3.8918573e-05
        %v1837 = vadd.f32 %v1836, 0.001143296
        %v1838 = vmul.f32 %v1824, %v1837
        %v1839 = vadd.f32 %v1838, 0.014752088
        %v1840 = vmul.f32 %v1824, %v1839
        %v1841 = vadd.f32 %v1840, 0.112945676
        %v1842 = vmul.f32 %v1824, %v1841
        %v1843 = vadd.f32 %v1842, 0.4994258
        %v1844 = vmul.f32 %v1824, %v1843
        %v1845 = vadd.f32 %v1844, 1.0
        %v1846 = vrcp.pop %v1845
        %v1847 = vmul.f32 %v1845, %v1846
        %v1848 = vsub.f32 1.0, %v1847
        %v1849 = vmul.f32 %v1846, %v1848
        %v1850 = vadd.f32 %v1846, %v1849
        %vm1851 = vweird.f32 %v1845
        %vm1852 = vweird.f32 %v1846
        %vm1853 = vmor %vm1851, %vm1852
        %v1854 = vsel %vm1853, %v1846, %v1850
        %v1855 = vand.u32 2147483647, %v1845
        %vm1856 = vcmp.eq.f32.partialorder %v1855, 8.507059e+37
        %v1857 = vand.u32 %v1845, 2147483648
        %v1858 = vor.u32 1.1754944e-38, %v1857
        %v1859 = vsel %vm1856, %v1858, %v1854
        %v1860 = vmul.f32 %v1835, %v1859
        %v1861 = vmin.f32 %v1860, 1.0
        %v1862 = vmax.f32 %v1861, -1.0
        %v1863 = vmul.f32 %v1045, %v1045
        %v1864 = vmin.f32 16.0, %v1863
        %v1865 = vmul.f32 %v1864, 2.1237322e-06
        %v1866 = vadd.f32 %v1865, 0.00028619796
        %v1867 = vmul.f32 %v1864, %v1866
        %v1868 = vadd.f32 %v1867, 0.0036580483
        %v1869 = vmul.f32 %v1864, %v1868
        %v1870 = vadd.f32 %v1869, 0.05243302
        %v1871 = vmul.f32 %v1864, %v1870
        %v1872 = vadd.f32 %v1871, 0.18741608
        %v1873 = vmul.f32 %v1864, %v1872
        %v1874 = vadd.f32 %v1873, 1.1283791
        %v1875 = vmul.f32 %v1045, %v1874
        %v1876 = vmul.f32 %v1864, 3.8918573e-05
        %v1877 = vadd.f32 %v1876, 0.001143296
        %v1878 = vmul.f32 %v1864, %v1877
        %v1879 = vadd.f32 %v1878, 0.014752088
        %v1880 = vmul.f32 %v1864, %v1879
        %v1881 = vadd.f32 %v1880, 0.112945676
        %v1882 = vmul.f32 %v1864, %v1881
        %v1883 = vadd.f32 %v1882, 0.4994258
        %v1884 = vmul.f32 %v1864, %v1883
        %v1885 = vadd.f32 %v1884, 1.0
        %v1886 = vrcp.pop %v1885
        %v1887 = vmul.f32 %v1885, %v1886
        %v1888 = vsub.f32 1.0, %v1887
        %v1889 = vmul.f32 %v1886, %v1888
        %v1890 = vadd.f32 %v1886, %v1889
        %vm1891 = vweird.f32 %v1885
        %vm1892 = vweird.f32 %v1886
        %vm1893 = vmor %vm1891, %vm1892
        %v1894 = vsel %vm1893, %v1886, %v1890
        %v1895 = vand.u32 2147483647, %v1885
        %vm1896 = vcmp.eq.f32.partialorder %v1895, 8.507059e+37
        %v1897 = vand.u32 %v1885, 2147483648
        %v1898 = vor.u32 1.1754944e-38, %v1897
        %v1899 = vsel %vm1896, %v1898, %v1894
        %v1900 = vmul.f32 %v1875, %v1899
        %v1901 = vmin.f32 %v1900, 1.0
        %v1902 = vmax.f32 %v1901, -1.0
        %v1903 = vmul.f32 %v1046, %v1046
        %v1904 = vmin.f32 16.0, %v1903
        %v1905 = vmul.f32 %v1904, 2.1237322e-06
        %v1906 = vadd.f32 %v1905, 0.00028619796
        %v1907 = vmul.f32 %v1904, %v1906
        %v1908 = vadd.f32 %v1907, 0.0036580483
        %v1909 = vmul.f32 %v1904, %v1908
        %v1910 = vadd.f32 %v1909, 0.05243302
        %v1911 = vmul.f32 %v1904, %v1910
        %v1912 = vadd.f32 %v1911, 0.18741608
        %v1913 = vmul.f32 %v1904, %v1912
        %v1914 = vadd.f32 %v1913, 1.1283791
        %v1915 = vmul.f32 %v1046, %v1914
        %v1916 = vmul.f32 %v1904, 3.8918573e-05
        %v1917 = vadd.f32 %v1916, 0.001143296
        %v1918 = vmul.f32 %v1904, %v1917
        %v1919 = vadd.f32 %v1918, 0.014752088
        %v1920 = vmul.f32 %v1904, %v1919
        %v1921 = vadd.f32 %v1920, 0.112945676
        %v1922 = vmul.f32 %v1904, %v1921
        %v1923 = vadd.f32 %v1922, 0.4994258
        %v1924 = vmul.f32 %v1904, %v1923
        %v1925 = vadd.f32 %v1924, 1.0
        %v1926 = vrcp.pop %v1925
        %v1927 = vmul.f32 %v1925, %v1926
        %v1928 = vsub.f32 1.0, %v1927
        %v1929 = vmul.f32 %v1926, %v1928
        %v1930 = vadd.f32 %v1926, %v1929
        %vm1931 = vweird.f32 %v1925
        %vm1932 = vweird.f32 %v1926
        %vm1933 = vmor %vm1931, %vm1932
        %v1934 = vsel %vm1933, %v1926, %v1930
        %v1935 = vand.u32 2147483647, %v1925
        %vm1936 = vcmp.eq.f32.partialorder %v1935, 8.507059e+37
        %v1937 = vand.u32 %v1925, 2147483648
        %v1938 = vor.u32 1.1754944e-38, %v1937
        %v1939 = vsel %vm1936, %v1938, %v1934
        %v1940 = vmul.f32 %v1915, %v1939
        %v1941 = vmin.f32 %v1940, 1.0
        %v1942 = vmax.f32 %v1941, -1.0
        %v1943 = vmul.f32 %v1047, %v1047
        %v1944 = vmin.f32 16.0, %v1943
        %v1945 = vmul.f32 %v1944, 2.1237322e-06
        %v1946 = vadd.f32 %v1945, 0.00028619796
        %v1947 = vmul.f32 %v1944, %v1946
        %v1948 = vadd.f32 %v1947, 0.0036580483
        %v1949 = vmul.f32 %v1944, %v1948
        %v1950 = vadd.f32 %v1949, 0.05243302
        %v1951 = vmul.f32 %v1944, %v1950
        %v1952 = vadd.f32 %v1951, 0.18741608
        %v1953 = vmul.f32 %v1944, %v1952
        %v1954 = vadd.f32 %v1953, 1.1283791
        %v1955 = vmul.f32 %v1047, %v1954
        %v1956 = vmul.f32 %v1944, 3.8918573e-05
        %v1957 = vadd.f32 %v1956, 0.001143296
        %v1958 = vmul.f32 %v1944, %v1957
        %v1959 = vadd.f32 %v1958, 0.014752088
        %v1960 = vmul.f32 %v1944, %v1959
        %v1961 = vadd.f32 %v1960, 0.112945676
        %v1962 = vmul.f32 %v1944, %v1961
        %v1963 = vadd.f32 %v1962, 0.4994258
        %v1964 = vmul.f32 %v1944, %v1963
        %v1965 = vadd.f32 %v1964, 1.0
        %v1966 = vrcp.pop %v1965
        %v1967 = vmul.f32 %v1965, %v1966
        %v1968 = vsub.f32 1.0, %v1967
        %v1969 = vmul.f32 %v1966, %v1968
        %v1970 = vadd.f32 %v1966, %v1969
        %vm1971 = vweird.f32 %v1965
        %vm1972 = vweird.f32 %v1966
        %vm1973 = vmor %vm1971, %vm1972
        %v1974 = vsel %vm1973, %v1966, %v1970
        %v1975 = vand.u32 2147483647, %v1965
        %vm1976 = vcmp.eq.f32.partialorder %v1975, 8.507059e+37
        %v1977 = vand.u32 %v1965, 2147483648
        %v1978 = vor.u32 1.1754944e-38, %v1977
        %v1979 = vsel %vm1976, %v1978, %v1974
        %v1980 = vmul.f32 %v1955, %v1979
        %v1981 = vmin.f32 %v1980, 1.0
        %v1982 = vmax.f32 %v1981, -1.0
        %v1983 = vmul.f32 %v1048, %v1048
        %v1984 = vmin.f32 16.0, %v1983
        %v1985 = vmul.f32 %v1984, 2.1237322e-06
        %v1986 = vadd.f32 %v1985, 0.00028619796
        %v1987 = vmul.f32 %v1984, %v1986
        %v1988 = vadd.f32 %v1987, 0.0036580483
        %v1989 = vmul.f32 %v1984, %v1988
        %v1990 = vadd.f32 %v1989, 0.05243302
        %v1991 = vmul.f32 %v1984, %v1990
        %v1992 = vadd.f32 %v1991, 0.18741608
        %v1993 = vmul.f32 %v1984, %v1992
        %v1994 = vadd.f32 %v1993, 1.1283791
        %v1995 = vmul.f32 %v1048, %v1994
        %v1996 = vmul.f32 %v1984, 3.8918573e-05
        %v1997 = vadd.f32 %v1996, 0.001143296
        %v1998 = vmul.f32 %v1984, %v1997
        %v1999 = vadd.f32 %v1998, 0.014752088
        %v2000 = vmul.f32 %v1984, %v1999
        %v2001 = vadd.f32 %v2000, 0.112945676
        %v2002 = vmul.f32 %v1984, %v2001
        %v2003 = vadd.f32 %v2002, 0.4994258
        %v2004 = vmul.f32 %v1984, %v2003
        %v2005 = vadd.f32 %v2004, 1.0
        %v2006 = vrcp.pop %v2005
        %v2007 = vmul.f32 %v2005, %v2006
        %v2008 = vsub.f32 1.0, %v2007
        %v2009 = vmul.f32 %v2006, %v2008
        %v2010 = vadd.f32 %v2006, %v2009
        %vm2011 = vweird.f32 %v2005
        %vm2012 = vweird.f32 %v2006
        %vm2013 = vmor %vm2011, %vm2012
        %v2014 = vsel %vm2013, %v2006, %v2010
        %v2015 = vand.u32 2147483647, %v2005
        %vm2016 = vcmp.eq.f32.partialorder %v2015, 8.507059e+37
        %v2017 = vand.u32 %v2005, 2147483648
        %v2018 = vor.u32 1.1754944e-38, %v2017
        %v2019 = vsel %vm2016, %v2018, %v2014
        %v2020 = vmul.f32 %v1995, %v2019
        %v2021 = vmin.f32 %v2020, 1.0
        %v2022 = vmax.f32 %v2021, -1.0
        %v2023 = vmul.f32 %v1049, %v1049
        %v2024 = vmin.f32 16.0, %v2023
        %v2025 = vmul.f32 %v2024, 2.1237322e-06
        %v2026 = vadd.f32 %v2025, 0.00028619796
        %v2027 = vmul.f32 %v2024, %v2026
        %v2028 = vadd.f32 %v2027, 0.0036580483
        %v2029 = vmul.f32 %v2024, %v2028
        %v2030 = vadd.f32 %v2029, 0.05243302
        %v2031 = vmul.f32 %v2024, %v2030
        %v2032 = vadd.f32 %v2031, 0.18741608
        %v2033 = vmul.f32 %v2024, %v2032
        %v2034 = vadd.f32 %v2033, 1.1283791
        %v2035 = vmul.f32 %v1049, %v2034
        %v2036 = vmul.f32 %v2024, 3.8918573e-05
        %v2037 = vadd.f32 %v2036, 0.001143296
        %v2038 = vmul.f32 %v2024, %v2037
        %v2039 = vadd.f32 %v2038, 0.014752088
        %v2040 = vmul.f32 %v2024, %v2039
        %v2041 = vadd.f32 %v2040, 0.112945676
        %v2042 = vmul.f32 %v2024, %v2041
        %v2043 = vadd.f32 %v2042, 0.4994258
        %v2044 = vmul.f32 %v2024, %v2043
        %v2045 = vadd.f32 %v2044, 1.0
        %v2046 = vrcp.pop %v2045
        %v2047 = vmul.f32 %v2045, %v2046
        %v2048 = vsub.f32 1.0, %v2047
        %v2049 = vmul.f32 %v2046, %v2048
        %v2050 = vadd.f32 %v2046, %v2049
        %vm2051 = vweird.f32 %v2045
        %vm2052 = vweird.f32 %v2046
        %vm2053 = vmor %vm2051, %vm2052
        %v2054 = vsel %vm2053, %v2046, %v2050
        %v2055 = vand.u32 2147483647, %v2045
        %vm2056 = vcmp.eq.f32.partialorder %v2055, 8.507059e+37
        %v2057 = vand.u32 %v2045, 2147483648
        %v2058 = vor.u32 1.1754944e-38, %v2057
        %v2059 = vsel %vm2056, %v2058, %v2054
        %v2060 = vmul.f32 %v2035, %v2059
        %v2061 = vmin.f32 %v2060, 1.0
        %v2062 = vmax.f32 %v2061, -1.0
        %v2063 = vmul.f32 %v1050, %v1050
        %v2064 = vmin.f32 16.0, %v2063
        %v2065 = vmul.f32 %v2064, 2.1237322e-06
        %v2066 = vadd.f32 %v2065, 0.00028619796
        %v2067 = vmul.f32 %v2064, %v2066
        %v2068 = vadd.f32 %v2067, 0.0036580483
        %v2069 = vmul.f32 %v2064, %v2068
        %v2070 = vadd.f32 %v2069, 0.05243302
        %v2071 = vmul.f32 %v2064, %v2070
        %v2072 = vadd.f32 %v2071, 0.18741608
        %v2073 = vmul.f32 %v2064, %v2072
        %v2074 = vadd.f32 %v2073, 1.1283791
        %v2075 = vmul.f32 %v1050, %v2074
        %v2076 = vmul.f32 %v2064, 3.8918573e-05
        %v2077 = vadd.f32 %v2076, 0.001143296
        %v2078 = vmul.f32 %v2064, %v2077
        %v2079 = vadd.f32 %v2078, 0.014752088
        %v2080 = vmul.f32 %v2064, %v2079
        %v2081 = vadd.f32 %v2080, 0.112945676
        %v2082 = vmul.f32 %v2064, %v2081
        %v2083 = vadd.f32 %v2082, 0.4994258
        %v2084 = vmul.f32 %v2064, %v2083
        %v2085 = vadd.f32 %v2084, 1.0
        %v2086 = vrcp.pop %v2085
        %v2087 = vmul.f32 %v2085, %v2086
        %v2088 = vsub.f32 1.0, %v2087
        %v2089 = vmul.f32 %v2086, %v2088
        %v2090 = vadd.f32 %v2086, %v2089
        %vm2091 = vweird.f32 %v2085
        %vm2092 = vweird.f32 %v2086
        %vm2093 = vmor %vm2091, %vm2092
        %v2094 = vsel %vm2093, %v2086, %v2090
        %v2095 = vand.u32 2147483647, %v2085
        %vm2096 = vcmp.eq.f32.partialorder %v2095, 8.507059e+37
        %v2097 = vand.u32 %v2085, 2147483648
        %v2098 = vor.u32 1.1754944e-38, %v2097
        %v2099 = vsel %vm2096, %v2098, %v2094
        %v2100 = vmul.f32 %v2075, %v2099
        %v2101 = vmin.f32 %v2100, 1.0
        %v2102 = vmax.f32 %v2101, -1.0
        %v2103 = vmul.f32 %v1051, %v1051
        %v2104 = vmin.f32 16.0, %v2103
        %v2105 = vmul.f32 %v2104, 2.1237322e-06
        %v2106 = vadd.f32 %v2105, 0.00028619796
        %v2107 = vmul.f32 %v2104, %v2106
        %v2108 = vadd.f32 %v2107, 0.0036580483
        %v2109 = vmul.f32 %v2104, %v2108
        %v2110 = vadd.f32 %v2109, 0.05243302
        %v2111 = vmul.f32 %v2104, %v2110
        %v2112 = vadd.f32 %v2111, 0.18741608
        %v2113 = vmul.f32 %v2104, %v2112
        %v2114 = vadd.f32 %v2113, 1.1283791
        %v2115 = vmul.f32 %v1051, %v2114
        %v2116 = vmul.f32 %v2104, 3.8918573e-05
        %v2117 = vadd.f32 %v2116, 0.001143296
        %v2118 = vmul.f32 %v2104, %v2117
        %v2119 = vadd.f32 %v2118, 0.014752088
        %v2120 = vmul.f32 %v2104, %v2119
        %v2121 = vadd.f32 %v2120, 0.112945676
        %v2122 = vmul.f32 %v2104, %v2121
        %v2123 = vadd.f32 %v2122, 0.4994258
        %v2124 = vmul.f32 %v2104, %v2123
        %v2125 = vadd.f32 %v2124, 1.0
        %v2126 = vrcp.pop %v2125
        %v2127 = vmul.f32 %v2125, %v2126
        %v2128 = vsub.f32 1.0, %v2127
        %v2129 = vmul.f32 %v2126, %v2128
        %v2130 = vadd.f32 %v2126, %v2129
        %vm2131 = vweird.f32 %v2125
        %vm2132 = vweird.f32 %v2126
        %vm2133 = vmor %vm2131, %vm2132
        %v2134 = vsel %vm2133, %v2126, %v2130
        %v2135 = vand.u32 2147483647, %v2125
        %vm2136 = vcmp.eq.f32.partialorder %v2135, 8.507059e+37
        %v2137 = vand.u32 %v2125, 2147483648
        %v2138 = vor.u32 1.1754944e-38, %v2137
        %v2139 = vsel %vm2136, %v2138, %v2134
        %v2140 = vmul.f32 %v2115, %v2139
        %v2141 = vmin.f32 %v2140, 1.0
        %v2142 = vmax.f32 %v2141, -1.0
        %v2143 = vmul.f32 %v1052, %v1052
        %v2144 = vmin.f32 16.0, %v2143
        %v2145 = vmul.f32 %v2144, 2.1237322e-06
        %v2146 = vadd.f32 %v2145, 0.00028619796
        %v2147 = vmul.f32 %v2144, %v2146
        %v2148 = vadd.f32 %v2147, 0.0036580483
        %v2149 = vmul.f32 %v2144, %v2148
        %v2150 = vadd.f32 %v2149, 0.05243302
        %v2151 = vmul.f32 %v2144, %v2150
        %v2152 = vadd.f32 %v2151, 0.18741608
        %v2153 = vmul.f32 %v2144, %v2152
        %v2154 = vadd.f32 %v2153, 1.1283791
        %v2155 = vmul.f32 %v1052, %v2154
        %v2156 = vmul.f32 %v2144, 3.8918573e-05
        %v2157 = vadd.f32 %v2156, 0.001143296
        %v2158 = vmul.f32 %v2144, %v2157
        %v2159 = vadd.f32 %v2158, 0.014752088
        %v2160 = vmul.f32 %v2144, %v2159
        %v2161 = vadd.f32 %v2160, 0.112945676
        %v2162 = vmul.f32 %v2144, %v2161
        %v2163 = vadd.f32 %v2162, 0.4994258
        %v2164 = vmul.f32 %v2144, %v2163
        %v2165 = vadd.f32 %v2164, 1.0
        %v2166 = vrcp.pop %v2165
        %v2167 = vmul.f32 %v2165, %v2166
        %v2168 = vsub.f32 1.0, %v2167
        %v2169 = vmul.f32 %v2166, %v2168
        %v2170 = vadd.f32 %v2166, %v2169
        %vm2171 = vweird.f32 %v2165
        %vm2172 = vweird.f32 %v2166
        %vm2173 = vmor %vm2171, %vm2172
        %v2174 = vsel %vm2173, %v2166, %v2170
        %v2175 = vand.u32 2147483647, %v2165
        %vm2176 = vcmp.eq.f32.partialorder %v2175, 8.507059e+37
        %v2177 = vand.u32 %v2165, 2147483648
        %v2178 = vor.u32 1.1754944e-38, %v2177
        %v2179 = vsel %vm2176, %v2178, %v2174
        %v2180 = vmul.f32 %v2155, %v2179
        %v2181 = vmin.f32 %v2180, 1.0
        %v2182 = vmax.f32 %v2181, -1.0
        %v2183 = vmul.f32 %v1053, %v1053
        %v2184 = vmin.f32 16.0, %v2183
        %v2185 = vmul.f32 %v2184, 2.1237322e-06
        %v2186 = vadd.f32 %v2185, 0.00028619796
        %v2187 = vmul.f32 %v2184, %v2186
        %v2188 = vadd.f32 %v2187, 0.0036580483
        %v2189 = vmul.f32 %v2184, %v2188
        %v2190 = vadd.f32 %v2189, 0.05243302
        %v2191 = vmul.f32 %v2184, %v2190
        %v2192 = vadd.f32 %v2191, 0.18741608
        %v2193 = vmul.f32 %v2184, %v2192
        %v2194 = vadd.f32 %v2193, 1.1283791
        %v2195 = vmul.f32 %v1053, %v2194
        %v2196 = vmul.f32 %v2184, 3.8918573e-05
        %v2197 = vadd.f32 %v2196, 0.001143296
        %v2198 = vmul.f32 %v2184, %v2197
        %v2199 = vadd.f32 %v2198, 0.014752088
        %v2200 = vmul.f32 %v2184, %v2199
        %v2201 = vadd.f32 %v2200, 0.112945676
        %v2202 = vmul.f32 %v2184, %v2201
        %v2203 = vadd.f32 %v2202, 0.4994258
        %v2204 = vmul.f32 %v2184, %v2203
        %v2205 = vadd.f32 %v2204, 1.0
        %v2206 = vrcp.pop %v2205
        %v2207 = vmul.f32 %v2205, %v2206
        %v2208 = vsub.f32 1.0, %v2207
        %v2209 = vmul.f32 %v2206, %v2208
        %v2210 = vadd.f32 %v2206, %v2209
        %vm2211 = vweird.f32 %v2205
        %vm2212 = vweird.f32 %v2206
        %vm2213 = vmor %vm2211, %vm2212
        %v2214 = vsel %vm2213, %v2206, %v2210
        %v2215 = vand.u32 2147483647, %v2205
        %vm2216 = vcmp.eq.f32.partialorder %v2215, 8.507059e+37
        %v2217 = vand.u32 %v2205, 2147483648
        %v2218 = vor.u32 1.1754944e-38, %v2217
        %v2219 = vsel %vm2216, %v2218, %v2214
        %v2220 = vmul.f32 %v2195, %v2219
        %v2221 = vmin.f32 %v2220, 1.0
        %v2222 = vmax.f32 %v2221, -1.0
        %v2223 = vmul.f32 %v1054, %v1054
        %v2224 = vmin.f32 16.0, %v2223
        %v2225 = vmul.f32 %v2224, 2.1237322e-06
        %v2226 = vadd.f32 %v2225, 0.00028619796
        %v2227 = vmul.f32 %v2224, %v2226
        %v2228 = vadd.f32 %v2227, 0.0036580483
        %v2229 = vmul.f32 %v2224, %v2228
        %v2230 = vadd.f32 %v2229, 0.05243302
        %v2231 = vmul.f32 %v2224, %v2230
        %v2232 = vadd.f32 %v2231, 0.18741608
        %v2233 = vmul.f32 %v2224, %v2232
        %v2234 = vadd.f32 %v2233, 1.1283791
        %v2235 = vmul.f32 %v1054, %v2234
        %v2236 = vmul.f32 %v2224, 3.8918573e-05
        %v2237 = vadd.f32 %v2236, 0.001143296
        %v2238 = vmul.f32 %v2224, %v2237
        %v2239 = vadd.f32 %v2238, 0.014752088
        %v2240 = vmul.f32 %v2224, %v2239
        %v2241 = vadd.f32 %v2240, 0.112945676
        %v2242 = vmul.f32 %v2224, %v2241
        %v2243 = vadd.f32 %v2242, 0.4994258
        %v2244 = vmul.f32 %v2224, %v2243
        %v2245 = vadd.f32 %v2244, 1.0
        %v2246 = vrcp.pop %v2245
        %v2247 = vmul.f32 %v2245, %v2246
        %v2248 = vsub.f32 1.0, %v2247
        %v2249 = vmul.f32 %v2246, %v2248
        %v2250 = vadd.f32 %v2246, %v2249
        %vm2251 = vweird.f32 %v2245
        %vm2252 = vweird.f32 %v2246
        %vm2253 = vmor %vm2251, %vm2252
        %v2254 = vsel %vm2253, %v2246, %v2250
        %v2255 = vand.u32 2147483647, %v2245
        %vm2256 = vcmp.eq.f32.partialorder %v2255, 8.507059e+37
        %v2257 = vand.u32 %v2245, 2147483648
        %v2258 = vor.u32 1.1754944e-38, %v2257
        %v2259 = vsel %vm2256, %v2258, %v2254
        %v2260 = vmul.f32 %v2235, %v2259
        %v2261 = vmin.f32 %v2260, 1.0
        %v2262 = vmax.f32 %v2261, -1.0
        %v2263 = vmul.f32 %v1055, %v1055
        %v2264 = vmin.f32 16.0, %v2263
        %v2265 = vmul.f32 %v2264, 2.1237322e-06
        %v2266 = vadd.f32 %v2265, 0.00028619796
        %v2267 = vmul.f32 %v2264, %v2266
        %v2268 = vadd.f32 %v2267, 0.0036580483
        %v2269 = vmul.f32 %v2264, %v2268
        %v2270 = vadd.f32 %v2269, 0.05243302
        %v2271 = vmul.f32 %v2264, %v2270
        %v2272 = vadd.f32 %v2271, 0.18741608
        %v2273 = vmul.f32 %v2264, %v2272
        %v2274 = vadd.f32 %v2273, 1.1283791
        %v2275 = vmul.f32 %v1055, %v2274
        %v2276 = vmul.f32 %v2264, 3.8918573e-05
        %v2277 = vadd.f32 %v2276, 0.001143296
        %v2278 = vmul.f32 %v2264, %v2277
        %v2279 = vadd.f32 %v2278, 0.014752088
        %v2280 = vmul.f32 %v2264, %v2279
        %v2281 = vadd.f32 %v2280, 0.112945676
        %v2282 = vmul.f32 %v2264, %v2281
        %v2283 = vadd.f32 %v2282, 0.4994258
        %v2284 = vmul.f32 %v2264, %v2283
        %v2285 = vadd.f32 %v2284, 1.0
        %v2286 = vrcp.pop %v2285
        %v2287 = vmul.f32 %v2285, %v2286
        %v2288 = vsub.f32 1.0, %v2287
        %v2289 = vmul.f32 %v2286, %v2288
        %v2290 = vadd.f32 %v2286, %v2289
        %vm2291 = vweird.f32 %v2285
        %vm2292 = vweird.f32 %v2286
        %vm2293 = vmor %vm2291, %vm2292
        %v2294 = vsel %vm2293, %v2286, %v2290
        %v2295 = vand.u32 2147483647, %v2285
        %vm2296 = vcmp.eq.f32.partialorder %v2295, 8.507059e+37
        %v2297 = vand.u32 %v2285, 2147483648
        %v2298 = vor.u32 1.1754944e-38, %v2297
        %v2299 = vsel %vm2296, %v2298, %v2294
        %v2300 = vmul.f32 %v2275, %v2299
        %v2301 = vmin.f32 %v2300, 1.0
        %v2302 = vmax.f32 %v2301, -1.0
        %v2303 = vmul.f32 %v1056, %v1056
        %v2304 = vmin.f32 16.0, %v2303
        %v2305 = vmul.f32 %v2304, 2.1237322e-06
        %v2306 = vadd.f32 %v2305, 0.00028619796
        %v2307 = vmul.f32 %v2304, %v2306
        %v2308 = vadd.f32 %v2307, 0.0036580483
        %v2309 = vmul.f32 %v2304, %v2308
        %v2310 = vadd.f32 %v2309, 0.05243302
        %v2311 = vmul.f32 %v2304, %v2310
        %v2312 = vadd.f32 %v2311, 0.18741608
        %v2313 = vmul.f32 %v2304, %v2312
        %v2314 = vadd.f32 %v2313, 1.1283791
        %v2315 = vmul.f32 %v1056, %v2314
        %v2316 = vmul.f32 %v2304, 3.8918573e-05
        %v2317 = vadd.f32 %v2316, 0.001143296
        %v2318 = vmul.f32 %v2304, %v2317
        %v2319 = vadd.f32 %v2318, 0.014752088
        %v2320 = vmul.f32 %v2304, %v2319
        %v2321 = vadd.f32 %v2320, 0.112945676
        %v2322 = vmul.f32 %v2304, %v2321
        %v2323 = vadd.f32 %v2322, 0.4994258
        %v2324 = vmul.f32 %v2304, %v2323
        %v2325 = vadd.f32 %v2324, 1.0
        %v2326 = vrcp.pop %v2325
        %v2327 = vmul.f32 %v2325, %v2326
        %v2328 = vsub.f32 1.0, %v2327
        %v2329 = vmul.f32 %v2326, %v2328
        %v2330 = vadd.f32 %v2326, %v2329
        %vm2331 = vweird.f32 %v2325
        %vm2332 = vweird.f32 %v2326
        %vm2333 = vmor %vm2331, %vm2332
        %v2334 = vsel %vm2333, %v2326, %v2330
        %v2335 = vand.u32 2147483647, %v2325
        %vm2336 = vcmp.eq.f32.partialorder %v2335, 8.507059e+37
        %v2337 = vand.u32 %v2325, 2147483648
        %v2338 = vor.u32 1.1754944e-38, %v2337
        %v2339 = vsel %vm2336, %v2338, %v2334
        %v2340 = vmul.f32 %v2315, %v2339
        %v2341 = vmin.f32 %v2340, 1.0
        %v2342 = vmax.f32 %v2341, -1.0
        %v2343 = vmul.f32 %v1057, %v1057
        %v2344 = vmin.f32 16.0, %v2343
        %v2345 = vmul.f32 %v2344, 2.1237322e-06
        %v2346 = vadd.f32 %v2345, 0.00028619796
        %v2347 = vmul.f32 %v2344, %v2346
        %v2348 = vadd.f32 %v2347, 0.0036580483
        %v2349 = vmul.f32 %v2344, %v2348
        %v2350 = vadd.f32 %v2349, 0.05243302
        %v2351 = vmul.f32 %v2344, %v2350
        %v2352 = vadd.f32 %v2351, 0.18741608
        %v2353 = vmul.f32 %v2344, %v2352
        %v2354 = vadd.f32 %v2353, 1.1283791
        %v2355 = vmul.f32 %v1057, %v2354
        %v2356 = vmul.f32 %v2344, 3.8918573e-05
        %v2357 = vadd.f32 %v2356, 0.001143296
        %v2358 = vmul.f32 %v2344, %v2357
        %v2359 = vadd.f32 %v2358, 0.014752088
        %v2360 = vmul.f32 %v2344, %v2359
        %v2361 = vadd.f32 %v2360, 0.112945676
        %v2362 = vmul.f32 %v2344, %v2361
        %v2363 = vadd.f32 %v2362, 0.4994258
        %v2364 = vmul.f32 %v2344, %v2363
        %v2365 = vadd.f32 %v2364, 1.0
        %v2366 = vrcp.pop %v2365
        %v2367 = vmul.f32 %v2365, %v2366
        %v2368 = vsub.f32 1.0, %v2367
        %v2369 = vmul.f32 %v2366, %v2368
        %v2370 = vadd.f32 %v2366, %v2369
        %vm2371 = vweird.f32 %v2365
        %vm2372 = vweird.f32 %v2366
        %vm2373 = vmor %vm2371, %vm2372
        %v2374 = vsel %vm2373, %v2366, %v2370
        %v2375 = vand.u32 2147483647, %v2365
        %vm2376 = vcmp.eq.f32.partialorder %v2375, 8.507059e+37
        %v2377 = vand.u32 %v2365, 2147483648
        %v2378 = vor.u32 1.1754944e-38, %v2377
        %v2379 = vsel %vm2376, %v2378, %v2374
        %v2380 = vmul.f32 %v2355, %v2379
        %v2381 = vmin.f32 %v2380, 1.0
        %v2382 = vmax.f32 %v2381, -1.0
        %v2383 = vmul.f32 %v1058, %v1058
        %v2384 = vmin.f32 16.0, %v2383
        %v2385 = vmul.f32 %v2384, 2.1237322e-06
        %v2386 = vadd.f32 %v2385, 0.00028619796
        %v2387 = vmul.f32 %v2384, %v2386
        %v2388 = vadd.f32 %v2387, 0.0036580483
        %v2389 = vmul.f32 %v2384, %v2388
        %v2390 = vadd.f32 %v2389, 0.05243302
        %v2391 = vmul.f32 %v2384, %v2390
        %v2392 = vadd.f32 %v2391, 0.18741608
        %v2393 = vmul.f32 %v2384, %v2392
        %v2394 = vadd.f32 %v2393, 1.1283791
        %v2395 = vmul.f32 %v1058, %v2394
        %v2396 = vmul.f32 %v2384, 3.8918573e-05
        %v2397 = vadd.f32 %v2396, 0.001143296
        %v2398 = vmul.f32 %v2384, %v2397
        %v2399 = vadd.f32 %v2398, 0.014752088
        %v2400 = vmul.f32 %v2384, %v2399
        %v2401 = vadd.f32 %v2400, 0.112945676
        %v2402 = vmul.f32 %v2384, %v2401
        %v2403 = vadd.f32 %v2402, 0.4994258
        %v2404 = vmul.f32 %v2384, %v2403
        %v2405 = vadd.f32 %v2404, 1.0
        %v2406 = vrcp.pop %v2405
        %v2407 = vmul.f32 %v2405, %v2406
        %v2408 = vsub.f32 1.0, %v2407
        %v2409 = vmul.f32 %v2406, %v2408
        %v2410 = vadd.f32 %v2406, %v2409
        %vm2411 = vweird.f32 %v2405
        %vm2412 = vweird.f32 %v2406
        %vm2413 = vmor %vm2411, %vm2412
        %v2414 = vsel %vm2413, %v2406, %v2410
        %v2415 = vand.u32 2147483647, %v2405
        %vm2416 = vcmp.eq.f32.partialorder %v2415, 8.507059e+37
        %v2417 = vand.u32 %v2405, 2147483648
        %v2418 = vor.u32 1.1754944e-38, %v2417
        %v2419 = vsel %vm2416, %v2418, %v2414
        %v2420 = vmul.f32 %v2395, %v2419
        %v2421 = vmin.f32 %v2420, 1.0
        %v2422 = vmax.f32 %v2421, -1.0
        %v2423 = vmul.f32 %v1059, %v1059
        %v2424 = vmin.f32 16.0, %v2423
        %v2425 = vmul.f32 %v2424, 2.1237322e-06
        %v2426 = vadd.f32 %v2425, 0.00028619796
        %v2427 = vmul.f32 %v2424, %v2426
        %v2428 = vadd.f32 %v2427, 0.0036580483
        %v2429 = vmul.f32 %v2424, %v2428
        %v2430 = vadd.f32 %v2429, 0.05243302
        %v2431 = vmul.f32 %v2424, %v2430
        %v2432 = vadd.f32 %v2431, 0.18741608
        %v2433 = vmul.f32 %v2424, %v2432
        %v2434 = vadd.f32 %v2433, 1.1283791
        %v2435 = vmul.f32 %v1059, %v2434
        %v2436 = vmul.f32 %v2424, 3.8918573e-05
        %v2437 = vadd.f32 %v2436, 0.001143296
        %v2438 = vmul.f32 %v2424, %v2437
        %v2439 = vadd.f32 %v2438, 0.014752088
        %v2440 = vmul.f32 %v2424, %v2439
        %v2441 = vadd.f32 %v2440, 0.112945676
        %v2442 = vmul.f32 %v2424, %v2441
        %v2443 = vadd.f32 %v2442, 0.4994258
        %v2444 = vmul.f32 %v2424, %v2443
        %v2445 = vadd.f32 %v2444, 1.0
        %v2446 = vrcp.pop %v2445
        %v2447 = vmul.f32 %v2445, %v2446
        %v2448 = vsub.f32 1.0, %v2447
        %v2449 = vmul.f32 %v2446, %v2448
        %v2450 = vadd.f32 %v2446, %v2449
        %vm2451 = vweird.f32 %v2445
        %vm2452 = vweird.f32 %v2446
        %vm2453 = vmor %vm2451, %vm2452
        %v2454 = vsel %vm2453, %v2446, %v2450
        %v2455 = vand.u32 2147483647, %v2445
        %vm2456 = vcmp.eq.f32.partialorder %v2455, 8.507059e+37
        %v2457 = vand.u32 %v2445, 2147483648
        %v2458 = vor.u32 1.1754944e-38, %v2457
        %v2459 = vsel %vm2456, %v2458, %v2454
        %v2460 = vmul.f32 %v2435, %v2459
        %v2461 = vmin.f32 %v2460, 1.0
        %v2462 = vmax.f32 %v2461, -1.0
        %v2463 = vmul.f32 %v1060, %v1060
        %v2464 = vmin.f32 16.0, %v2463
        %v2465 = vmul.f32 %v2464, 2.1237322e-06
        %v2466 = vadd.f32 %v2465, 0.00028619796
        %v2467 = vmul.f32 %v2464, %v2466
        %v2468 = vadd.f32 %v2467, 0.0036580483
        %v2469 = vmul.f32 %v2464, %v2468
        %v2470 = vadd.f32 %v2469, 0.05243302
        %v2471 = vmul.f32 %v2464, %v2470
        %v2472 = vadd.f32 %v2471, 0.18741608
        %v2473 = vmul.f32 %v2464, %v2472
        %v2474 = vadd.f32 %v2473, 1.1283791
        %v2475 = vmul.f32 %v1060, %v2474
        %v2476 = vmul.f32 %v2464, 3.8918573e-05
        %v2477 = vadd.f32 %v2476, 0.001143296
        %v2478 = vmul.f32 %v2464, %v2477
        %v2479 = vadd.f32 %v2478, 0.014752088
        %v2480 = vmul.f32 %v2464, %v2479
        %v2481 = vadd.f32 %v2480, 0.112945676
        %v2482 = vmul.f32 %v2464, %v2481
        %v2483 = vadd.f32 %v2482, 0.4994258
        %v2484 = vmul.f32 %v2464, %v2483
        %v2485 = vadd.f32 %v2484, 1.0
        %v2486 = vrcp.pop %v2485
        %v2487 = vmul.f32 %v2485, %v2486
        %v2488 = vsub.f32 1.0, %v2487
        %v2489 = vmul.f32 %v2486, %v2488
        %v2490 = vadd.f32 %v2486, %v2489
        %vm2491 = vweird.f32 %v2485
        %vm2492 = vweird.f32 %v2486
        %vm2493 = vmor %vm2491, %vm2492
        %v2494 = vsel %vm2493, %v2486, %v2490
        %v2495 = vand.u32 2147483647, %v2485
        %vm2496 = vcmp.eq.f32.partialorder %v2495, 8.507059e+37
        %v2497 = vand.u32 %v2485, 2147483648
        %v2498 = vor.u32 1.1754944e-38, %v2497
        %v2499 = vsel %vm2496, %v2498, %v2494
        %v2500 = vmul.f32 %v2475, %v2499
        %v2501 = vmin.f32 %v2500, 1.0
        %v2502 = vmax.f32 %v2501, -1.0
        %v2503 = vmul.f32 %v1061, %v1061
        %v2504 = vmin.f32 16.0, %v2503
        %v2505 = vmul.f32 %v2504, 2.1237322e-06
        %v2506 = vadd.f32 %v2505, 0.00028619796
        %v2507 = vmul.f32 %v2504, %v2506
        %v2508 = vadd.f32 %v2507, 0.0036580483
        %v2509 = vmul.f32 %v2504, %v2508
        %v2510 = vadd.f32 %v2509, 0.05243302
        %v2511 = vmul.f32 %v2504, %v2510
        %v2512 = vadd.f32 %v2511, 0.18741608
        %v2513 = vmul.f32 %v2504, %v2512
        %v2514 = vadd.f32 %v2513, 1.1283791
        %v2515 = vmul.f32 %v1061, %v2514
        %v2516 = vmul.f32 %v2504, 3.8918573e-05
        %v2517 = vadd.f32 %v2516, 0.001143296
        %v2518 = vmul.f32 %v2504, %v2517
        %v2519 = vadd.f32 %v2518, 0.014752088
        %v2520 = vmul.f32 %v2504, %v2519
        %v2521 = vadd.f32 %v2520, 0.112945676
        %v2522 = vmul.f32 %v2504, %v2521
        %v2523 = vadd.f32 %v2522, 0.4994258
        %v2524 = vmul.f32 %v2504, %v2523
        %v2525 = vadd.f32 %v2524, 1.0
        %v2526 = vrcp.pop %v2525
        %v2527 = vmul.f32 %v2525, %v2526
        %v2528 = vsub.f32 1.0, %v2527
        %v2529 = vmul.f32 %v2526, %v2528
        %v2530 = vadd.f32 %v2526, %v2529
        %vm2531 = vweird.f32 %v2525
        %vm2532 = vweird.f32 %v2526
        %vm2533 = vmor %vm2531, %vm2532
        %v2534 = vsel %vm2533, %v2526, %v2530
        %v2535 = vand.u32 2147483647, %v2525
        %vm2536 = vcmp.eq.f32.partialorder %v2535, 8.507059e+37
        %v2537 = vand.u32 %v2525, 2147483648
        %v2538 = vor.u32 1.1754944e-38, %v2537
        %v2539 = vsel %vm2536, %v2538, %v2534
        %v2540 = vmul.f32 %v2515, %v2539
        %v2541 = vmin.f32 %v2540, 1.0
        %v2542 = vmax.f32 %v2541, -1.0
        %v2543 = vmul.f32 %v1062, %v1062
        %v2544 = vmin.f32 16.0, %v2543
        %v2545 = vmul.f32 %v2544, 2.1237322e-06
        %v2546 = vadd.f32 %v2545, 0.00028619796
        %v2547 = vmul.f32 %v2544, %v2546
        %v2548 = vadd.f32 %v2547, 0.0036580483
        %v2549 = vmul.f32 %v2544, %v2548
        %v2550 = vadd.f32 %v2549, 0.05243302
        %v2551 = vmul.f32 %v2544, %v2550
        %v2552 = vadd.f32 %v2551, 0.18741608
        %v2553 = vmul.f32 %v2544, %v2552
        %v2554 = vadd.f32 %v2553, 1.1283791
        %v2555 = vmul.f32 %v1062, %v2554
        %v2556 = vmul.f32 %v2544, 3.8918573e-05
        %v2557 = vadd.f32 %v2556, 0.001143296
        %v2558 = vmul.f32 %v2544, %v2557
        %v2559 = vadd.f32 %v2558, 0.014752088
        %v2560 = vmul.f32 %v2544, %v2559
        %v2561 = vadd.f32 %v2560, 0.112945676
        %v2562 = vmul.f32 %v2544, %v2561
        %v2563 = vadd.f32 %v2562, 0.4994258
        %v2564 = vmul.f32 %v2544, %v2563
        %v2565 = vadd.f32 %v2564, 1.0
        %v2566 = vrcp.pop %v2565
        %v2567 = vmul.f32 %v2565, %v2566
        %v2568 = vsub.f32 1.0, %v2567
        %v2569 = vmul.f32 %v2566, %v2568
        %v2570 = vadd.f32 %v2566, %v2569
        %vm2571 = vweird.f32 %v2565
        %vm2572 = vweird.f32 %v2566
        %vm2573 = vmor %vm2571, %vm2572
        %v2574 = vsel %vm2573, %v2566, %v2570
        %v2575 = vand.u32 2147483647, %v2565
        %vm2576 = vcmp.eq.f32.partialorder %v2575, 8.507059e+37
        %v2577 = vand.u32 %v2565, 2147483648
        %v2578 = vor.u32 1.1754944e-38, %v2577
        %v2579 = vsel %vm2576, %v2578, %v2574
        %v2580 = vmul.f32 %v2555, %v2579
        %v2581 = vmin.f32 %v2580, 1.0
        %v2582 = vmax.f32 %v2581, -1.0
        %v2583 = vadd.f32 %v1102, 1.0
        %v2584 = vadd.f32 %v1142, 1.0
        %v2585 = vadd.f32 %v1182, 1.0
        %v2586 = vadd.f32 %v1222, 1.0
        %v2587 = vadd.f32 %v1262, 1.0
        %v2588 = vadd.f32 %v1302, 1.0
        %v2589 = vadd.f32 %v1342, 1.0
        %v2590 = vadd.f32 %v1382, 1.0
        %v2591 = vadd.f32 %v1422, 1.0
        %v2592 = vadd.f32 %v1462, 1.0
        %v2593 = vadd.f32 %v1502, 1.0
        %v2594 = vadd.f32 %v1542, 1.0
        %v2595 = vadd.f32 %v1582, 1.0
        %v2596 = vadd.f32 %v1622, 1.0
        %v2597 = vadd.f32 %v1662, 1.0
        %v2598 = vadd.f32 %v1702, 1.0
        %v2599 = vadd.f32 %v1742, 1.0
        %v2600 = vadd.f32 %v1782, 1.0
        %v2601 = vadd.f32 %v1822, 1.0
        %v2602 = vadd.f32 %v1862, 1.0
        %v2603 = vadd.f32 %v1902, 1.0
        %v2604 = vadd.f32 %v1942, 1.0
        %v2605 = vadd.f32 %v1982, 1.0
        %v2606 = vadd.f32 %v2022, 1.0
        %v2607 = vadd.f32 %v2062, 1.0
        %v2608 = vadd.f32 %v2102, 1.0
        %v2609 = vadd.f32 %v2142, 1.0
        %v2610 = vadd.f32 %v2182, 1.0
        %v2611 = vadd.f32 %v2222, 1.0
        %v2612 = vadd.f32 %v2262, 1.0
        %v2613 = vadd.f32 %v2302, 1.0
        %v2614 = vadd.f32 %v2342, 1.0
        %v2615 = vadd.f32 %v2382, 1.0
        %v2616 = vadd.f32 %v2422, 1.0
        %v2617 = vadd.f32 %v2462, 1.0
        %v2618 = vadd.f32 %v2502, 1.0
        %v2619 = vadd.f32 %v2542, 1.0
        %v2620 = vadd.f32 %v2582, 1.0
        %v2621 = vmul.f32 %v987, %v2583
        %v2622 = vmul.f32 %v988, %v2584
        %v2623 = vmul.f32 %v989, %v2585
        %v2624 = vmul.f32 %v990, %v2586
        %v2625 = vmul.f32 %v991, %v2587
        %v2626 = vmul.f32 %v992, %v2588
        %v2627 = vmul.f32 %v993, %v2589
        %v2628 = vmul.f32 %v994, %v2590
        %v2629 = vmul.f32 %v995, %v2591
        %v2630 = vmul.f32 %v996, %v2592
        %v2631 = vmul.f32 %v997, %v2593
        %v2632 = vmul.f32 %v998, %v2594
        %v2633 = vmul.f32 %v999, %v2595
        %v2634 = vmul.f32 %v1000, %v2596
        %v2635 = vmul.f32 %v1001, %v2597
        %v2636 = vmul.f32 %v1002, %v2598
        %v2637 = vmul.f32 %v1003, %v2599
        %v2638 = vmul.f32 %v1004, %v2600
        %v2639 = vmul.f32 %v1005, %v2601
        %v2640 = vmul.f32 %v1006, %v2602
        %v2641 = vmul.f32 %v1007, %v2603
        %v2642 = vmul.f32 %v1008, %v2604
        %v2643 = vmul.f32 %v1009, %v2605
        %v2644 = vmul.f32 %v1010, %v2606
        %v2645 = vmul.f32 %v1011, %v2607
        %v2646 = vmul.f32 %v1012, %v2608
        %v2647 = vmul.f32 %v1013, %v2609
        %v2648 = vmul.f32 %v1014, %v2610
        %v2649 = vmul.f32 %v1015, %v2611
        %v2650 = vmul.f32 %v1016, %v2612
        %v2651 = vmul.f32 %v1017, %v2613
        %v2652 = vmul.f32 %v1018, %v2614
        %v2653 = vmul.f32 %v1019, %v2615
        %v2654 = vmul.f32 %v1020, %v2616
        %v2655 = vmul.f32 %v1021, %v2617
        %v2656 = vmul.f32 %v1022, %v2618
        %v2657 = vmul.f32 %v1023, %v2619
        %v2658 = vmul.f32 %v1024, %v2620
        %v2659 = vld [vmem:[#allocation8] sm:$0xff]
        %v2660 = vld [vmem:[#allocation8 + $0x8] sm:$0xff]
        %v2661 = vld [vmem:[#allocation8 + $0x10] sm:$0xff]
        %v2662 = vld [vmem:[#allocation8 + $0x18] sm:$0xff]
        %v2663 = vld [vmem:[#allocation8 + $0x20] sm:$0xff]
        %v2664 = vld [vmem:[#allocation8 + $0x28] sm:$0xff]
        %v2665 = vld [vmem:[#allocation8 + $0x30] sm:$0xff]
        %v2666 = vld [vmem:[#allocation8 + $0x38] sm:$0xff]
        %v2667 = vld [vmem:[#allocation8 + $0x40] sm:$0xff]
        %v2668 = vld [vmem:[#allocation8 + $0x48] sm:$0xff]
        %v2669 = vld [vmem:[#allocation8 + $0x50] sm:$0xff]
        %v2670 = vld [vmem:[#allocation8 + $0x58] sm:$0xff]
        %v2671 = vld [vmem:[#allocation8 + $0x60] sm:$0xff]
        %v2672 = vld [vmem:[#allocation8 + $0x68] sm:$0xff]
        %v2673 = vld [vmem:[#allocation8 + $0x70] sm:$0xff]
        %v2674 = vld [vmem:[#allocation8 + $0x78] sm:$0xff]
        %v2675 = vld [vmem:[#allocation8 + $0x80] sm:$0xff]
        %v2676 = vld [vmem:[#allocation8 + $0x88] sm:$0xff]
        %v2677 = vld [vmem:[#allocation8 + $0x90] sm:$0xff]
        %v2678 = vld [vmem:[#allocation8 + $0x98] sm:$0xff]
        %v2679 = vld [vmem:[#allocation8 + $0xa0] sm:$0xff]
        %v2680 = vld [vmem:[#allocation8 + $0xa8] sm:$0xff]
        %v2681 = vld [vmem:[#allocation8 + $0xb0] sm:$0xff]
        %v2682 = vld [vmem:[#allocation8 + $0xb8] sm:$0xff]
        %v2683 = vld [vmem:[#allocation8 + $0xc0] sm:$0xff]
        %v2684 = vld [vmem:[#allocation8 + $0xc8] sm:$0xff]
        %v2685 = vld [vmem:[#allocation8 + $0xd0] sm:$0xff]
        %v2686 = vld [vmem:[#allocation8 + $0xd8] sm:$0xff]
        %v2687 = vld [vmem:[#allocation8 + $0xe0] sm:$0xff]
        %v2688 = vld [vmem:[#allocation8 + $0xe8] sm:$0xff]
        %v2689 = vld [vmem:[#allocation8 + $0xf0] sm:$0xff]
        %v2690 = vld [vmem:[#allocation8 + $0xf8] sm:$0xff]
        %v2691 = vld [vmem:[%s6] sm:$0x1]
        %v2693 = vperm.slane %v2691, 0
        %2695 = vmatpush.msra.mxu0 %v2674
        %2696 = vmatpush.msra.mxu0 %v2673
        %2697 = vmatpush.msra.mxu0 %v2672
        %2698 = vmatpush.msra.mxu0 %v2671
        %2699 = vmatpush.msra.mxu0 %v2670
        %2700 = vmatpush.msra.mxu0 %v2669
        %2701 = vmatpush.msra.mxu0 %v2668
        %2702 = vmatpush.msra.mxu0 %v2667
        %2703 = vmatpush.msra.mxu0 %v2666
        %2704 = vmatpush.msra.mxu0 %v2665
        %2705 = vmatpush.msra.mxu0 %v2664
        %2706 = vmatpush.msra.mxu0 %v2663
        %2707 = vmatpush.msra.mxu0 %v2662
        %2708 = vmatpush.msra.mxu0 %v2661
        %2709 = vmatpush.msra.mxu0 %v2660
        %2710 = vmatpush.msra.mxu0 %v2659
        %2711 = vmatmul.f32.gmra.mxu0 %v2621
        %v2712 = vpop.f32.mrf.mxu0
        %v2713 = vadd.f32 %v2693, %v2712
        %2714 = vmatmul.f32.gmra.mxu0 %v2623
        %v2715 = vpop.f32.mrf.mxu0
        %v2716 = vadd.f32 %v2693, %v2715
        %2717 = vmatmul.f32.gmra.mxu0 %v2625
        %v2718 = vpop.f32.mrf.mxu0
        %v2719 = vadd.f32 %v2693, %v2718
        %2720 = vmatmul.f32.gmra.mxu0 %v2627
        %v2721 = vpop.f32.mrf.mxu0
        %v2722 = vadd.f32 %v2693, %v2721
        %2723 = vmatmul.f32.gmra.mxu0 %v2629
        %v2724 = vpop.f32.mrf.mxu0
        %v2725 = vadd.f32 %v2693, %v2724
        %2726 = vmatmul.f32.gmra.mxu0 %v2631
        %v2727 = vpop.f32.mrf.mxu0
        %v2728 = vadd.f32 %v2693, %v2727
        %2729 = vmatmul.f32.gmra.mxu0 %v2633
        %v2730 = vpop.f32.mrf.mxu0
        %v2731 = vadd.f32 %v2693, %v2730
        %2732 = vmatmul.f32.gmra.mxu0 %v2635
        %v2733 = vpop.f32.mrf.mxu0
        %v2734 = vadd.f32 %v2693, %v2733
        %2735 = vmatmul.f32.gmra.mxu0 %v2637
        %v2736 = vpop.f32.mrf.mxu0
        %v2737 = vadd.f32 %v2693, %v2736
        %2738 = vmatmul.f32.gmra.mxu0 %v2639
        %v2739 = vpop.f32.mrf.mxu0
        %v2740 = vadd.f32 %v2693, %v2739
        %2741 = vmatmul.f32.gmra.mxu0 %v2641
        %v2742 = vpop.f32.mrf.mxu0
        %v2743 = vadd.f32 %v2693, %v2742
        %2744 = vmatmul.f32.gmra.mxu0 %v2643
        %v2745 = vpop.f32.mrf.mxu0
        %v2746 = vadd.f32 %v2693, %v2745
        %2747 = vmatmul.f32.gmra.mxu0 %v2645
        %v2748 = vpop.f32.mrf.mxu0
        %v2749 = vadd.f32 %v2693, %v2748
        %2750 = vmatmul.f32.gmra.mxu0 %v2647
        %v2751 = vpop.f32.mrf.mxu0
        %v2752 = vadd.f32 %v2693, %v2751
        %2753 = vmatmul.f32.gmra.mxu0 %v2649
        %v2754 = vpop.f32.mrf.mxu0
        %v2755 = vadd.f32 %v2693, %v2754
        %2756 = vmatmul.f32.gmra.mxu0 %v2651
        %v2757 = vpop.f32.mrf.mxu0
        %v2758 = vadd.f32 %v2693, %v2757
        %2759 = vmatmul.f32.gmra.mxu0 %v2653
        %v2760 = vpop.f32.mrf.mxu0
        %v2761 = vadd.f32 %v2693, %v2760
        %2762 = vmatmul.f32.gmra.mxu0 %v2655
        %v2763 = vpop.f32.mrf.mxu0
        %v2764 = vadd.f32 %v2693, %v2763
        %2765 = vmatmul.f32.gmra.mxu0 %v2657
        %v2766 = vpop.f32.mrf.mxu0
        %v2767 = vadd.f32 %v2693, %v2766
        %2768 = vdwg.mxu0
        %2769 = vmatpush.msra.mxu0 %v2690
        %2770 = vmatpush.msra.mxu0 %v2689
        %2771 = vmatpush.msra.mxu0 %v2688
        %2772 = vmatpush.msra.mxu0 %v2687
        %2773 = vmatpush.msra.mxu0 %v2686
        %2774 = vmatpush.msra.mxu0 %v2685
        %2775 = vmatpush.msra.mxu0 %v2684
        %2776 = vmatpush.msra.mxu0 %v2683
        %2777 = vmatpush.msra.mxu0 %v2682
        %2778 = vmatpush.msra.mxu0 %v2681
        %2779 = vmatpush.msra.mxu0 %v2680
        %2780 = vmatpush.msra.mxu0 %v2679
        %2781 = vmatpush.msra.mxu0 %v2678
        %2782 = vmatpush.msra.mxu0 %v2677
        %2783 = vmatpush.msra.mxu0 %v2676
        %2784 = vmatpush.msra.mxu0 %v2675
        %2785 = vmatmul.f32.gmra.mxu0 %v2622
        %v2786 = vpop.f32.mrf.mxu0
        %v2787 = vadd.f32 %v2713, %v2786
        %2788 = vmatmul.f32.gmra.mxu0 %v2624
        %v2789 = vpop.f32.mrf.mxu0
        %v2790 = vadd.f32 %v2716, %v2789
        %2791 = vmatmul.f32.gmra.mxu0 %v2626
        %v2792 = vpop.f32.mrf.mxu0
        %v2793 = vadd.f32 %v2719, %v2792
        %2794 = vmatmul.f32.gmra.mxu0 %v2628
        %v2795 = vpop.f32.mrf.mxu0
        %v2796 = vadd.f32 %v2722, %v2795
        %2797 = vmatmul.f32.gmra.mxu0 %v2630
        %v2798 = vpop.f32.mrf.mxu0
        %v2799 = vadd.f32 %v2725, %v2798
        %2800 = vmatmul.f32.gmra.mxu0 %v2632
        %v2801 = vpop.f32.mrf.mxu0
        %v2802 = vadd.f32 %v2728, %v2801
        %2803 = vmatmul.f32.gmra.mxu0 %v2634
        %v2804 = vpop.f32.mrf.mxu0
        %v2805 = vadd.f32 %v2731, %v2804
        %2806 = vmatmul.f32.gmra.mxu0 %v2636
        %v2807 = vpop.f32.mrf.mxu0
        %v2808 = vadd.f32 %v2734, %v2807
        %2809 = vmatmul.f32.gmra.mxu0 %v2638
        %v2810 = vpop.f32.mrf.mxu0
        %v2811 = vadd.f32 %v2737, %v2810
        %2812 = vmatmul.f32.gmra.mxu0 %v2640
        %v2813 = vpop.f32.mrf.mxu0
        %v2814 = vadd.f32 %v2740, %v2813
        %2815 = vmatmul.f32.gmra.mxu0 %v2642
        %v2816 = vpop.f32.mrf.mxu0
        %v2817 = vadd.f32 %v2743, %v2816
        %2818 = vmatmul.f32.gmra.mxu0 %v2644
        %v2819 = vpop.f32.mrf.mxu0
        %v2820 = vadd.f32 %v2746, %v2819
        %2821 = vmatmul.f32.gmra.mxu0 %v2646
        %v2822 = vpop.f32.mrf.mxu0
        %v2823 = vadd.f32 %v2749, %v2822
        %2824 = vmatmul.f32.gmra.mxu0 %v2648
        %v2825 = vpop.f32.mrf.mxu0
        %v2826 = vadd.f32 %v2752, %v2825
        %2827 = vmatmul.f32.gmra.mxu0 %v2650
        %v2828 = vpop.f32.mrf.mxu0
        %v2829 = vadd.f32 %v2755, %v2828
        %2830 = vmatmul.f32.gmra.mxu0 %v2652
        %v2831 = vpop.f32.mrf.mxu0
        %v2832 = vadd.f32 %v2758, %v2831
        %2833 = vmatmul.f32.gmra.mxu0 %v2654
        %v2834 = vpop.f32.mrf.mxu0
        %v2835 = vadd.f32 %v2761, %v2834
        %2836 = vmatmul.f32.gmra.mxu0 %v2656
        %v2837 = vpop.f32.mrf.mxu0
        %v2838 = vadd.f32 %v2764, %v2837
        %2839 = vmatmul.f32.gmra.mxu0 %v2658
        %v2840 = vpop.f32.mrf.mxu0
        %v2841 = vadd.f32 %v2767, %v2840
        %2842 = vdwg.mxu0
        %2843 = vst [vmem:[%s346] sm:$0xff] %v2787
        %2844 = vst [vmem:[%s346 + $0x8] sm:$0xff] %v2790
        %2845 = vst [vmem:[%s346 + $0x10] sm:$0xff] %v2793
        %2846 = vst [vmem:[%s346 + $0x18] sm:$0xff] %v2796
        %2847 = vst [vmem:[%s346 + $0x20] sm:$0xff] %v2799
        %2848 = vst [vmem:[%s346 + $0x28] sm:$0xff] %v2802
        %2849 = vst [vmem:[%s346 + $0x30] sm:$0xff] %v2805
        %2850 = vst [vmem:[%s346 + $0x38] sm:$0xff] %v2808
        %2851 = vst [vmem:[%s346 + $0x40] sm:$0xff] %v2811
        %2852 = vst [vmem:[%s346 + $0x48] sm:$0xff] %v2814
        %2853 = vst [vmem:[%s346 + $0x50] sm:$0xff] %v2817
        %2854 = vst [vmem:[%s346 + $0x58] sm:$0xff] %v2820
        %2855 = vst [vmem:[%s346 + $0x60] sm:$0xff] %v2823
        %2856 = vst [vmem:[%s346 + $0x68] sm:$0xff] %v2826
        %2857 = vst [vmem:[%s346 + $0x70] sm:$0xff] %v2829
        %2858 = vst [vmem:[%s346 + $0x78] sm:$0xff] %v2832
        %2859 = vst [vmem:[%s346 + $0x80] sm:$0xff] %v2835
        %2860 = vst [vmem:[%s346 + $0x88] sm:$0xff] %v2838
        %2861 = vst [vmem:[%s346 + $0x90] sm:$0xff] %v2841
        %s2862 = sand.u32 %s186, 1
        %s2863 = scalar_lea.sflag [#allocation4], %s2862
        %s2864 = sand.u32 %s186, 1
        %s2865 = smul.addr %s2864, 152
        %s2866 = scalar_lea.vmem [#allocation10], %s2865
        // Predicated region
        $region65: #{tpu_custom_call.1} parent=47 // pred_check
          %p2867 = pneg %p196
        $region66: #{tpu_custom_call.1} parent=47 // pred_check_branch
          %2869 = sbr.rel (%p2867) target = $region68
        $region67: #{tpu_custom_call.1} parent=47 // pred_region
          %s2870 = smul.u32 19, %s26
          %2872 = vsyncadd %s2863, 0
          %s2873 = smul.addr %s2870, 8
          %s2874 = scalar_lea.hbm %s7, %s2873
          %s2875 = sshll.u32 %s2866, 4
          %s2876 = int_to_ptr.vmem [resolvable:$true] %s2875
          %s2877 = sshll.u32 %s2874, 4
          %s2878 = int_to_ptr.hbm [resolvable:$true] %s2877
          %2883 = dma.vmem_to_hbm [thread:$0]  %s2876, 2432, %s2878, %s2863, 128, 128, 8
        $region68: #{tpu_custom_call.1} parent=47 // pred_fallthru
          _
      $region48: #{tpu_custom_call.1} parent=5 // pred_fallthru
        _
      %p2884 = scmp.le.s32.totalorder 2, %s21
      // Predicated region
      $region69: #{tpu_custom_call.1} parent=5 // pred_check
        %p2885 = pneg %p2884
      $region70: #{tpu_custom_call.1} parent=5 // pred_check_branch
        %2887 = sbr.rel (%p2885) target = $region72
      $region71: #{tpu_custom_call.1} parent=5 // pred_region
        %s2888 = ssub.s32 %s21, 2
        // Predicated region
        $region73: #{tpu_custom_call.1} parent=71 // pred_check
          %p2889 = pneg %p202
        $region74: #{tpu_custom_call.1} parent=71 // pred_check_branch
          %2891 = sbr.rel (%p2889) target = $region76
        $region75: #{tpu_custom_call.1} parent=71 // pred_region
          %s2892 = sand.u32 %s187, 1
          %s2893 = scalar_lea.sflag [#allocation4], %s2892
          %s2894 = sand.u32 %s187, 1
          %s2895 = smul.addr %s2894, 152
          %s2896 = scalar_lea.vmem [#allocation10], %s2895
          %2898 = dma.done %s2893, 2432
        $region76: #{tpu_custom_call.1} parent=71 // pred_fallthru
          _
      $region72: #{tpu_custom_call.1} parent=5 // pred_fallthru
        _
    $region6: #{tpu_custom_call.1} parent=1 // loop_footer
      %s25 = sadd.s32 1, %s21
    $region7: #{tpu_custom_call.1} parent=1 // loop_footer_branch
      %20 = sbr.rel target = $region3
    $region8: #{tpu_custom_call.1} parent=1 // loop_exit
      _
    %2899 = vsyncpa [#allocation3], 1
    %s2900 = scalar_lea.sflag [#allocation3], 1
    %2901 = vsyncpa %s2900, 1
    %2902 = vsyncpa [#allocation6], 1
    %2903 = vsyncpa [#allocation9], 1
    %2904 = vsyncpa [#allocation4], 1
    %s2905 = scalar_lea.sflag [#allocation4], 1
    %2906 = vsyncpa %s2905, 1

</llo_original>
